<compile_context>
chip_gen: v7x
topology: tpu7x:2x2x1
jax: 0.10.0
libtpu: 0.0.40
codegen_flags: <defaults>
</compile_context>

<pallas_src>
import functools
import math

import jax
import jax.numpy as jnp
from jax.experimental import pallas as pl
from jax.experimental.pallas import tpu as pltpu

LANE = 128      # TPU lane width: keep feature dims lane-dense
SUBLANE = 8     # f32 sublane granularity for the batch tile


def _round_up(x, m):
    return (x + m - 1) // m * m


def fused_mlp_kernel(x_ref, *refs, relu_flags, out_pads):
    """Run one batch tile through the whole (per-layer padded) MLP.

    refs = (w0, w1, ..., w{L-1}, b_stack, o_ref).
    The activation is carried at the current layer's padded width through the
    unrolled layer loop (vregs / compiler-managed VMEM); intermediates never
    round-trip through HBM.
    """
    o_ref = refs[-1]
    b_ref = refs[-2]          # (L, max_pad_out) f32 bias table
    w_refs = refs[:-2]

    y = x_ref[...].astype(jnp.float32)
    for li, (relu, pout) in enumerate(zip(relu_flags, out_pads)):
        w = w_refs[li][...]
        # Cast the activation to the weight dtype (bf16 path) so the MXU runs
        # at its narrow-input rate; accumulate in f32.
        y = jnp.dot(y.astype(w.dtype), w, preferred_element_type=jnp.float32)
        y = y + b_ref[li:li + 1, :pout]     # f32 bias row, broadcasts over batch
        if relu:
            y = jnp.maximum(y, 0.0)
    o_ref[...] = y.astype(o_ref.dtype)
    # TODO(synk): for very large tile_b x pad (spills visible in bundle
    # dumps), stage the inter-layer activation in an explicit pltpu.VMEM
    # scratch instead of relying on the register allocator.


def init_autoencoder_params(num_layers, key, param_dtype=jnp.float32):
    """Build params mirroring Autoencoder(numLayers, encoders=False).

    Returns:
      raw_params: list of (W (din,dout), b (dout,), relu) for the reference.
      padded_ws:  list of per-layer zero-padded weights, each
                  (round_up(din,128), round_up(dout,128)) in `param_dtype`.
      b_stack:    (L, max_pad_out) f32 zero-padded bias table.
      relu_flags: tuple of bools, one per layer.
      pads:       tuple of (pad_in, pad_out) per layer.
      out_dim:    true output feature width (== num_layers[0]).
    PyTorch nn.Linear default init: U(-1/sqrt(fan_in)) for both W and b.
    """
    layer_dims = []
    relu_flags = []
    # encoder: Linear+ReLU pairs, then bottleneck Linear (no ReLU)
    for i in range(len(num_layers) - 2):
        layer_dims.append((num_layers[i], num_layers[i + 1]))
        relu_flags.append(True)
    layer_dims.append((num_layers[-2], num_layers[-1]))
    relu_flags.append(False)
    # decoder: Linear+ReLU pairs, then output Linear (no ReLU)
    for i in range(len(num_layers) - 1, 1, -1):
        layer_dims.append((num_layers[i], num_layers[i - 1]))
        relu_flags.append(True)
    layer_dims.append((num_layers[1], num_layers[0]))
    relu_flags.append(False)

    pads = tuple((_round_up(din, LANE), _round_up(dout, LANE))
                 for din, dout in layer_dims)
    max_pout = max(p for _, p in pads)

    raw_params = []
    padded_ws = []
    b_stack = jnp.zeros((len(layer_dims), max_pout), jnp.float32)
    for li, ((din, dout), (pin, pout), relu) in enumerate(
            zip(layer_dims, pads, relu_flags)):
        key, kw, kb = jax.random.split(key, 3)
        bound = 1.0 / math.sqrt(din)
        w = jax.random.uniform(kw, (din, dout), jnp.float32, -bound, bound)
        b = jax.random.uniform(kb, (dout,), jnp.float32, -bound, bound)
        raw_params.append((w, b, relu))
        padded_ws.append(
            jnp.zeros((pin, pout), param_dtype).at[:din, :dout]
            .set(w.astype(param_dtype)))
        b_stack = b_stack.at[li, :dout].set(b)

    # TODO(synk): add an int8-quantized weight path (per-output-channel
    # scales, dequant fused into the bias/ReLU epilogue) for v5e/v6e; not
    # portable to v7x (fp8-only MXU), so gate by chip generation.

    out_dim = layer_dims[-1][1]
    return raw_params, padded_ws, b_stack, tuple(relu_flags), pads, out_dim


def _choose_tile_b(batch, requested):
    b_pad = _round_up(max(batch, SUBLANE), SUBLANE)
    tile = _round_up(min(requested, b_pad), SUBLANE)
    # Keep >= 2 grid steps when the batch allows so the "parallel" batch axis
    # actually splits across both v7x TensorCores (1 step = 1 idle TC).
    if b_pad // tile < 2 and b_pad >= 2 * SUBLANE:
        tile = _round_up((b_pad + 1) // 2, SUBLANE)
    b_pad = _round_up(b_pad, tile)
    return tile, b_pad


def autoencoder_forward(x, padded_ws, b_stack, relu_flags, pads, out_dim,
                        tile_b=512, single_buffer_weights=True):
    """Fused forward pass: one pallas_call for the whole autoencoder."""
    B, din = x.shape
    pad_in = pads[0][0]
    pad_out = pads[-1][1]
    out_pads = tuple(p for _, p in pads)

    tile_b, b_pad = _choose_tile_b(B, tile_b)

    # Skip the extra HBM pad copy when the input is already tile-aligned and
    # lane-dense.
    if b_pad == B and pad_in == din:
        x_in = x
    else:
        x_in = jnp.zeros((b_pad, pad_in), x.dtype).at[:B, :din].set(x)

    kernel = functools.partial(
        fused_mlp_kernel, relu_flags=relu_flags, out_pads=out_pads)

    # VMEM budget (conservative: assume double-buffered weights) -> scoped
    # limit only raised when the default would be too small.
    w_bytes = sum(int(w.size) * w.dtype.itemsize for w in padded_ws)
    b_bytes = int(b_stack.size) * b_stack.dtype.itemsize
    io_bytes = (2 * tile_b * pad_in * x.dtype.itemsize
                + 2 * tile_b * pad_out * 4)
    est_bytes = 2 * (w_bytes + b_bytes) + io_bytes
    vmem_limit = None
    if est_bytes > (12 << 20):
        vmem_limit = min(64 << 20, est_bytes + (8 << 20))   # v7x-safe cap
    # TODO(synk): if the single-buffered weights alone exceed ~48 MiB (v7x
    # budget), stream per-layer weights (pltpu.emit_pipeline / manual
    # make_async_copy double-buffer with K/N tiling) instead of keeping every
    # layer VMEM-resident.

    def run(single_buffer):
        const_kw = dict(pipeline_mode=pl.Buffered(1)) if single_buffer else {}
        in_specs = [pl.BlockSpec((tile_b, pad_in), lambda i: (i, 0))]
        for w in padded_ws:
            # Constant block index -> weights stay VMEM-resident across batch
            # tiles (no re-DMA per grid step); Buffered(1) drops the unused
            # second pipeline buffer.
            in_specs.append(pl.BlockSpec(w.shape, lambda i: (0, 0), **const_kw))
        in_specs.append(
            pl.BlockSpec(b_stack.shape, lambda i: (0, 0), **const_kw))
        return pl.pallas_call(
            kernel,
            out_shape=jax.ShapeDtypeStruct((b_pad, pad_out), x.dtype),
            grid=(b_pad // tile_b,),
            in_specs=in_specs,
            out_specs=pl.BlockSpec((tile_b, pad_out), lambda i: (i, 0)),
            compiler_params=pltpu.CompilerParams(
                dimension_semantics=("parallel",),   # megacore split on v7x
                vmem_limit_bytes=vmem_limit),
        )(x_in, *padded_ws, b_stack)

    if single_buffer_weights:
        try:
            out = jax.block_until_ready(run(True))
        except Exception:
            # pipeline_mode=Buffered(1) rejected by this JAX build; fall back
            # to default (double-buffered, still constant-index) weights.
            out = run(False)
    else:
        out = run(False)

    if b_pad == B and pad_out == out_dim:
        return out
    return out[:B, :out_dim]


def autoencoder_reference(x, raw_params):
    """Pure-JAX reference (unpadded) for correctness checking."""
    y = x
    for w, b, relu in raw_params:
        y = y @ w + b
        if relu:
            y = jnp.maximum(y, 0.0)
    return y


if __name__ == "__main__":
    # Autoencoder([200, 64, 24], encoders=False): layers
    # 200->64 (ReLU), 64->24, 24->64 (ReLU), 64->200 — exercises per-layer
    # padding (256/128-wide padded tiles).
    num_layers = [200, 64, 24]
    batch = 256

    key = jax.random.PRNGKey(0)
    key, kx = jax.random.split(key)
    x = jax.random.normal(kx, (batch, num_layers[0]), jnp.float32)

    # f32 weight path: tight check against the unpadded reference.
    raw, ws, bs, relus, pads, out_dim = init_autoencoder_params(
        num_layers, key, jnp.float32)
    out = autoencoder_forward(x, ws, bs, relus, pads, out_dim, tile_b=512)
    out = jax.block_until_ready(out)
    ref = autoencoder_reference(x, raw)
    assert out.shape == (batch, num_layers[0])
    assert jnp.allclose(out, ref, atol=1e-4, rtol=1e-4), \
        "f32 Pallas output mismatch"

    # bf16 weight path (v6e/v7x MXU rate, half the weight VMEM/DMA bytes):
    # f32 accumulation, so only a loose tolerance is needed.
    _, ws16, bs16, relus16, pads16, out_dim16 = init_autoencoder_params(
        num_layers, key, jnp.bfloat16)
    out16 = autoencoder_forward(x, ws16, bs16, relus16, pads16, out_dim16,
                                tile_b=512)
    out16 = jax.block_until_ready(out16)
    assert out16.shape == (batch, num_layers[0])
    assert jnp.allclose(out16, ref, atol=5e-2, rtol=5e-2), \
        "bf16 Pallas output mismatch"

    print("KERNEL_OK")
</pallas_src>

<mosaic_0001>
module attributes {stable_mosaic.version = 11 : i64} {
  func.func @fused_mlp_kernel(%arg0: i32, %arg1: memref<128x256xf32, #tpu.memory_space<vmem>>, %arg2: memref<256x128xf32, #tpu.memory_space<vmem>>, %arg3: memref<128x128xf32, #tpu.memory_space<vmem>>, %arg4: memref<128x128xf32, #tpu.memory_space<vmem>>, %arg5: memref<128x256xf32, #tpu.memory_space<vmem>>, %arg6: memref<4x256xf32, #tpu.memory_space<vmem>>, %arg7: memref<128x256xf32, #tpu.memory_space<vmem>>) attributes {dimension_semantics = [#tpu.dimension_semantics<parallel>], iteration_bounds = array<i64: 2>, scalar_prefetch = 0 : i64, scratch_operands = 0 : i64, tpu.core_type = #tpu.core_type<tc>, window_params = [{transform_indices = @transform_0, window_bounds = array<i64: 128, 256>}, {pipeline_mode = #tpu.pipeline_mode<synchronous>, transform_indices = @transform_1, window_bounds = array<i64: 256, 128>}, {pipeline_mode = #tpu.pipeline_mode<synchronous>, transform_indices = @transform_2, window_bounds = array<i64: 128, 128>}, {pipeline_mode = #tpu.pipeline_mode<synchronous>, transform_indices = @transform_3, window_bounds = array<i64: 128, 128>}, {pipeline_mode = #tpu.pipeline_mode<synchronous>, transform_indices = @transform_4, window_bounds = array<i64: 128, 256>}, {pipeline_mode = #tpu.pipeline_mode<synchronous>, transform_indices = @transform_5, window_bounds = array<i64: 4, 256>}, {transform_indices = @transform_6, window_bounds = array<i64: 128, 256>}]} {
    %c0 = arith.constant 0 : index
    %c0_0 = arith.constant 0 : index
    %0 = vector.load %arg1[%c0, %c0_0] : memref<128x256xf32, #tpu.memory_space<vmem>>, vector<128x256xf32>
    %c0_1 = arith.constant 0 : index
    %c0_2 = arith.constant 0 : index
    %1 = vector.load %arg2[%c0_1, %c0_2] : memref<256x128xf32, #tpu.memory_space<vmem>>, vector<256x128xf32>
    %cst = arith.constant dense<0.000000e+00> : vector<128x128xf32>
    %2 = tpu.matmul %0, %1, %cst {dimension_numbers = #tpu.dot_dimension_numbers<[1], [0], [0], [1], [0, 0, 1, 1], [], []>} : vector<128x256xf32>, vector<256x128xf32>, vector<128x128xf32> -> vector<128x128xf32>
    %c0_3 = arith.constant 0 : index
    %c0_4 = arith.constant 0 : index
    %3 = vector.load %arg6[%c0_3, %c0_4] : memref<4x256xf32, #tpu.memory_space<vmem>>, vector<1x128xf32>
    %4 = vector.broadcast %3 : vector<1x128xf32> to vector<128x128xf32>
    %5 = arith.addf %2, %4 : vector<128x128xf32>
    %cst_5 = arith.constant 0.000000e+00 : f32
    %6 = vector.broadcast %cst_5 : f32 to vector<128x128xf32>
    %7 = arith.maximumf %5, %6 : vector<128x128xf32>
    %c0_6 = arith.constant 0 : index
    %c0_7 = arith.constant 0 : index
    %8 = vector.load %arg3[%c0_6, %c0_7] : memref<128x128xf32, #tpu.memory_space<vmem>>, vector<128x128xf32>
    %cst_8 = arith.constant dense<0.000000e+00> : vector<128x128xf32>
    %9 = tpu.matmul %7, %8, %cst_8 {dimension_numbers = #tpu.dot_dimension_numbers<[1], [0], [0], [1], [0, 0, 1, 1], [], []>} : vector<128x128xf32>, vector<128x128xf32>, vector<128x128xf32> -> vector<128x128xf32>
    %c1 = arith.constant 1 : index
    %c0_9 = arith.constant 0 : index
    %10 = vector.load %arg6[%c1, %c0_9] : memref<4x256xf32, #tpu.memory_space<vmem>>, vector<1x128xf32>
    %11 = vector.broadcast %10 : vector<1x128xf32> to vector<128x128xf32>
    %12 = arith.addf %9, %11 : vector<128x128xf32>
    %c0_10 = arith.constant 0 : index
    %c0_11 = arith.constant 0 : index
    %13 = vector.load %arg4[%c0_10, %c0_11] : memref<128x128xf32, #tpu.memory_space<vmem>>, vector<128x128xf32>
    %cst_12 = arith.constant dense<0.000000e+00> : vector<128x128xf32>
    %14 = tpu.matmul %12, %13, %cst_12 {dimension_numbers = #tpu.dot_dimension_numbers<[1], [0], [0], [1], [0, 0, 1, 1], [], []>} : vector<128x128xf32>, vector<128x128xf32>, vector<128x128xf32> -> vector<128x128xf32>
    %c2 = arith.constant 2 : index
    %c0_13 = arith.constant 0 : index
    %15 = vector.load %arg6[%c2, %c0_13] : memref<4x256xf32, #tpu.memory_space<vmem>>, vector<1x128xf32>
    %16 = vector.broadcast %15 : vector<1x128xf32> to vector<128x128xf32>
    %17 = arith.addf %14, %16 : vector<128x128xf32>
    %cst_14 = arith.constant 0.000000e+00 : f32
    %18 = vector.broadcast %cst_14 : f32 to vector<128x128xf32>
    %19 = arith.maximumf %17, %18 : vector<128x128xf32>
    %c0_15 = arith.constant 0 : index
    %c0_16 = arith.constant 0 : index
    %20 = vector.load %arg5[%c0_15, %c0_16] : memref<128x256xf32, #tpu.memory_space<vmem>>, vector<128x256xf32>
    %cst_17 = arith.constant dense<0.000000e+00> : vector<128x256xf32>
    %21 = tpu.matmul %19, %20, %cst_17 {dimension_numbers = #tpu.dot_dimension_numbers<[1], [0], [0], [1], [0, 0, 1, 1], [], []>} : vector<128x128xf32>, vector<128x256xf32>, vector<128x256xf32> -> vector<128x256xf32>
    %c3 = arith.constant 3 : index
    %c0_18 = arith.constant 0 : index
    %22 = vector.load %arg6[%c3, %c0_18] : memref<4x256xf32, #tpu.memory_space<vmem>>, vector<1x256xf32>
    %23 = vector.broadcast %22 : vector<1x256xf32> to vector<128x256xf32>
    %24 = arith.addf %21, %23 : vector<128x256xf32>
    %c0_19 = arith.constant 0 : index
    %c0_20 = arith.constant 0 : index
    %25 = vector.load %arg7[%c0_19, %c0_20] : memref<128x256xf32, #tpu.memory_space<vmem>>, vector<128x256xf32>
    tpu.vector_store %arg7[%c0_19, %c0_20], %24 {strides = array<i32>} : memref<128x256xf32, #tpu.memory_space<vmem>>, vector<128x256xf32>,
    return
  }
  func.func @transform_0(%arg0: i32) -> (i32, i32) {
    %c0_i32 = arith.constant 0 : i32
    %c0_i32_0 = arith.constant 0 : i32
    return %arg0, %c0_i32 : i32, i32
  }
  func.func @transform_1(%arg0: i32) -> (i32, i32) {
    %c0_i32 = arith.constant 0 : i32
    %c0_i32_0 = arith.constant 0 : i32
    %c0_i32_1 = arith.constant 0 : i32
    return %c0_i32, %c0_i32_0 : i32, i32
  }
  func.func @transform_2(%arg0: i32) -> (i32, i32) {
    %c0_i32 = arith.constant 0 : i32
    %c0_i32_0 = arith.constant 0 : i32
    %c0_i32_1 = arith.constant 0 : i32
    return %c0_i32, %c0_i32_0 : i32, i32
  }
  func.func @transform_3(%arg0: i32) -> (i32, i32) {
    %c0_i32 = arith.constant 0 : i32
    %c0_i32_0 = arith.constant 0 : i32
    %c0_i32_1 = arith.constant 0 : i32
    return %c0_i32, %c0_i32_0 : i32, i32
  }
  func.func @transform_4(%arg0: i32) -> (i32, i32) {
    %c0_i32 = arith.constant 0 : i32
    %c0_i32_0 = arith.constant 0 : i32
    %c0_i32_1 = arith.constant 0 : i32
    return %c0_i32, %c0_i32_0 : i32, i32
  }
  func.func @transform_5(%arg0: i32) -> (i32, i32) {
    %c0_i32 = arith.constant 0 : i32
    %c0_i32_0 = arith.constant 0 : i32
    %c0_i32_1 = arith.constant 0 : i32
    return %c0_i32, %c0_i32_0 : i32, i32
  }
  func.func @transform_6(%arg0: i32) -> (i32, i32) {
    %c0_i32 = arith.constant 0 : i32
    %c0_i32_0 = arith.constant 0 : i32
    return %arg0, %c0_i32 : i32, i32
  }
}

module attributes {stable_mosaic.version = 11 : i64} {
  func.func @fused_mlp_kernel(%arg0: i32, %arg1: memref<128x256xf32, #tpu.memory_space<vmem>>, %arg2: memref<256x128xf32, #tpu.memory_space<vmem>>, %arg3: memref<128x128xf32, #tpu.memory_space<vmem>>, %arg4: memref<128x128xf32, #tpu.memory_space<vmem>>, %arg5: memref<128x256xf32, #tpu.memory_space<vmem>>, %arg6: memref<4x256xf32, #tpu.memory_space<vmem>>, %arg7: memref<128x256xf32, #tpu.memory_space<vmem>>) attributes {dimension_semantics = [#tpu.dimension_semantics<parallel>], iteration_bounds = array<i64: 2>, scalar_prefetch = 0 : i64, scratch_operands = 0 : i64, tpu.core_type = #tpu.core_type<tc>, window_params = [{transform_indices = @transform_0, window_bounds = array<i64: 128, 256>}, {pipeline_mode = #tpu.pipeline_mode<synchronous>, transform_indices = @transform_1, window_bounds = array<i64: 256, 128>}, {pipeline_mode = #tpu.pipeline_mode<synchronous>, transform_indices = @transform_2, window_bounds = array<i64: 128, 128>}, {pipeline_mode = #tpu.pipeline_mode<synchronous>, transform_indices = @transform_3, window_bounds = array<i64: 128, 128>}, {pipeline_mode = #tpu.pipeline_mode<synchronous>, transform_indices = @transform_4, window_bounds = array<i64: 128, 256>}, {pipeline_mode = #tpu.pipeline_mode<synchronous>, transform_indices = @transform_5, window_bounds = array<i64: 4, 256>}, {transform_indices = @transform_6, window_bounds = array<i64: 128, 256>}]} {
    %c0 = arith.constant 0 : index
    %c0_0 = arith.constant 0 : index
    %0 = vector.load %arg1[%c0, %c0_0] : memref<128x256xf32, #tpu.memory_space<vmem>>, vector<128x256xf32>
    %c0_1 = arith.constant 0 : index
    %c0_2 = arith.constant 0 : index
    %1 = vector.load %arg2[%c0_1, %c0_2] : memref<256x128xf32, #tpu.memory_space<vmem>>, vector<256x128xf32>
    %cst = arith.constant dense<0.000000e+00> : vector<128x128xf32>
    %2 = tpu.matmul %0, %1, %cst {dimension_numbers = #tpu.dot_dimension_numbers<[1], [0], [0], [1], [0, 0, 1, 1], [], []>} : vector<128x256xf32>, vector<256x128xf32>, vector<128x128xf32> -> vector<128x128xf32>
    %c0_3 = arith.constant 0 : index
    %c0_4 = arith.constant 0 : index
    %3 = vector.load %arg6[%c0_3, %c0_4] : memref<4x256xf32, #tpu.memory_space<vmem>>, vector<1x128xf32>
    %4 = vector.broadcast %3 : vector<1x128xf32> to vector<128x128xf32>
    %5 = arith.addf %2, %4 : vector<128x128xf32>
    %cst_5 = arith.constant 0.000000e+00 : f32
    %6 = vector.broadcast %cst_5 : f32 to vector<128x128xf32>
    %7 = arith.maximumf %5, %6 : vector<128x128xf32>
    %c0_6 = arith.constant 0 : index
    %c0_7 = arith.constant 0 : index
    %8 = vector.load %arg3[%c0_6, %c0_7] : memref<128x128xf32, #tpu.memory_space<vmem>>, vector<128x128xf32>
    %cst_8 = arith.constant dense<0.000000e+00> : vector<128x128xf32>
    %9 = tpu.matmul %7, %8, %cst_8 {dimension_numbers = #tpu.dot_dimension_numbers<[1], [0], [0], [1], [0, 0, 1, 1], [], []>} : vector<128x128xf32>, vector<128x128xf32>, vector<128x128xf32> -> vector<128x128xf32>
    %c1 = arith.constant 1 : index
    %c0_9 = arith.constant 0 : index
    %10 = vector.load %arg6[%c1, %c0_9] : memref<4x256xf32, #tpu.memory_space<vmem>>, vector<1x128xf32>
    %11 = vector.broadcast %10 : vector<1x128xf32> to vector<128x128xf32>
    %12 = arith.addf %9, %11 : vector<128x128xf32>
    %c0_10 = arith.constant 0 : index
    %c0_11 = arith.constant 0 : index
    %13 = vector.load %arg4[%c0_10, %c0_11] : memref<128x128xf32, #tpu.memory_space<vmem>>, vector<128x128xf32>
    %cst_12 = arith.constant dense<0.000000e+00> : vector<128x128xf32>
    %14 = tpu.matmul %12, %13, %cst_12 {dimension_numbers = #tpu.dot_dimension_numbers<[1], [0], [0], [1], [0, 0, 1, 1], [], []>} : vector<128x128xf32>, vector<128x128xf32>, vector<128x128xf32> -> vector<128x128xf32>
    %c2 = arith.constant 2 : index
    %c0_13 = arith.constant 0 : index
    %15 = vector.load %arg6[%c2, %c0_13] : memref<4x256xf32, #tpu.memory_space<vmem>>, vector<1x128xf32>
    %16 = vector.broadcast %15 : vector<1x128xf32> to vector<128x128xf32>
    %17 = arith.addf %14, %16 : vector<128x128xf32>
    %cst_14 = arith.constant 0.000000e+00 : f32
    %18 = vector.broadcast %cst_14 : f32 to vector<128x128xf32>
    %19 = arith.maximumf %17, %18 : vector<128x128xf32>
    %c0_15 = arith.constant 0 : index
    %c0_16 = arith.constant 0 : index
    %20 = vector.load %arg5[%c0_15, %c0_16] : memref<128x256xf32, #tpu.memory_space<vmem>>, vector<128x256xf32>
    %cst_17 = arith.constant dense<0.000000e+00> : vector<128x256xf32>
    %21 = tpu.matmul %19, %20, %cst_17 {dimension_numbers = #tpu.dot_dimension_numbers<[1], [0], [0], [1], [0, 0, 1, 1], [], []>} : vector<128x128xf32>, vector<128x256xf32>, vector<128x256xf32> -> vector<128x256xf32>
    %c3 = arith.constant 3 : index
    %c0_18 = arith.constant 0 : index
    %22 = vector.load %arg6[%c3, %c0_18] : memref<4x256xf32, #tpu.memory_space<vmem>>, vector<1x256xf32>
    %23 = vector.broadcast %22 : vector<1x256xf32> to vector<128x256xf32>
    %24 = arith.addf %21, %23 : vector<128x256xf32>
    %c0_19 = arith.constant 0 : index
    %c0_20 = arith.constant 0 : index
    %25 = vector.load %arg7[%c0_19, %c0_20] : memref<128x256xf32, #tpu.memory_space<vmem>>, vector<128x256xf32>
    tpu.vector_store %arg7[%c0_19, %c0_20], %24 {strides = array<i32>} : memref<128x256xf32, #tpu.memory_space<vmem>>, vector<128x256xf32>,
    return
  }
  func.func @transform_0(%arg0: i32) -> (i32, i32) {
    %c0_i32 = arith.constant 0 : i32
    %c0_i32_0 = arith.constant 0 : i32
    return %arg0, %c0_i32 : i32, i32
  }
  func.func @transform_1(%arg0: i32) -> (i32, i32) {
    %c0_i32 = arith.constant 0 : i32
    %c0_i32_0 = arith.constant 0 : i32
    %c0_i32_1 = arith.constant 0 : i32
    return %c0_i32, %c0_i32_0 : i32, i32
  }
  func.func @transform_2(%arg0: i32) -> (i32, i32) {
    %c0_i32 = arith.constant 0 : i32
    %c0_i32_0 = arith.constant 0 : i32
    %c0_i32_1 = arith.constant 0 : i32
    return %c0_i32, %c0_i32_0 : i32, i32
  }
  func.func @transform_3(%arg0: i32) -> (i32, i32) {
    %c0_i32 = arith.constant 0 : i32
    %c0_i32_0 = arith.constant 0 : i32
    %c0_i32_1 = arith.constant 0 : i32
    return %c0_i32, %c0_i32_0 : i32, i32
  }
  func.func @transform_4(%arg0: i32) -> (i32, i32) {
    %c0_i32 = arith.constant 0 : i32
    %c0_i32_0 = arith.constant 0 : i32
    %c0_i32_1 = arith.constant 0 : i32
    return %c0_i32, %c0_i32_0 : i32, i32
  }
  func.func @transform_5(%arg0: i32) -> (i32, i32) {
    %c0_i32 = arith.constant 0 : i32
    %c0_i32_0 = arith.constant 0 : i32
    %c0_i32_1 = arith.constant 0 : i32
    return %c0_i32, %c0_i32_0 : i32, i32
  }
  func.func @transform_6(%arg0: i32) -> (i32, i32) {
    %c0_i32 = arith.constant 0 : i32
    %c0_i32_0 = arith.constant 0 : i32
    return %arg0, %c0_i32 : i32, i32
  }
}

</mosaic_0001>

<llo_original>
// kernel: tpu_custom_call.1
$region0: #{tpu_custom_call.1}
  #allocation0 [shape = 'u32[]', space=smem, size = 0x4, offset = 0x4, fixed_abs, tag = 'smem constant byte address 0x4 - core index']
  #allocation1 [shape = 'u32[144,128]{1,0:T(1,128)}', space=vmem, size = 0x12000, scoped, tag = 'internal scratch']
  %s0 = inlined_call_operand.hbm [shape: f32[256,256], index: 0, kind: input, shape index: {}]
  %s1 = inlined_call_operand.hbm [shape: f32[256,128], index: 1, kind: input, shape index: {}]
  %s2 = inlined_call_operand.hbm [shape: f32[128,128], index: 2, kind: input, shape index: {}]
  %s3 = inlined_call_operand.hbm [shape: f32[128,128], index: 3, kind: input, shape index: {}]
  %s4 = inlined_call_operand.hbm [shape: f32[128,256], index: 4, kind: input, shape index: {}]
  %s5 = inlined_call_operand.vmem [shape: f32[4,256], index: 5, kind: input, shape index: {}]
  %s6 = inlined_call_operand.hbm [shape: f32[256,256], index: 6, kind: output, shape index: {}]
  %s7 = sld [smem:[#allocation0]]
  $region77: #{tpu_custom_call.1} parent=0
    _
  %s9 = ssub.s32 1, %s7
  %s10 = scalar_select 0, %s9, %s7
  $region1: #{tpu_custom_call.1} parent=0
    #allocation2 [shape = 'u8[262144]{0}', space=vmem, size = 0x40000, scoped, tag = 'input window, operand 0']
    #allocation3 [shape = 's32[2]{0}', space=sflag, size = 0x8, scoped, tag = 'scoped memory for tpu_custom_call.1']
    #allocation4 [shape = 's32[2]{0}', space=sflag, size = 0x8, scoped, tag = 'scoped memory for tpu_custom_call.1']
    #allocation5 [shape = 'u8[131072]{0}', space=vmem, size = 0x20000, scoped, tag = 'input window, operand 1, single buffered']
    #allocation6 [shape = 's32[1]{0}', space=sflag, size = 0x4, scoped, tag = 'scoped memory for tpu_custom_call.1']
    #allocation7 [shape = 'u8[65536]{0}', space=vmem, size = 0x10000, scoped, tag = 'input window, operand 2, single buffered']
    #allocation8 [shape = 'u8[65536]{0}', space=vmem, size = 0x10000, scoped, tag = 'input window, operand 3, single buffered']
    #allocation9 [shape = 's32[1]{0}', space=sflag, size = 0x4, scoped, tag = 'scoped memory for tpu_custom_call.1']
    #allocation10 [shape = 'u8[131072]{0}', space=vmem, size = 0x20000, scoped, tag = 'input window, operand 4, single buffered']
    #allocation11 [shape = 'u8[262144]{0}', space=vmem, size = 0x40000, scoped, tag = 'output window, operand 0']
    %11 = vsyncpa [#allocation3], 0
    %s12 = scalar_lea.sflag [#allocation3], 1
    %13 = vsyncpa %s12, 0
    %14 = vsyncpa [#allocation6], 0
    %15 = vsyncpa [#allocation9], 0
    %16 = vsyncpa [#allocation4], 0
    %s17 = scalar_lea.sflag [#allocation4], 1
    %18 = vsyncpa %s17, 0
    loop: start=0, step=1, limit=4
    $region2: #{tpu_custom_call.1} parent=1 // loop_pre_header
      _
    $region3: #{tpu_custom_call.1} parent=1 // loop_header
      %s20 = sphi 0, %s24
      %p21 = scmp.ge.s32.totalorder %s20, 4
      %s30 = sphi 0, %s32
      %s33 = sphi 0, %s30
      %s34 = sphi 0, %s33
      %s50 = sphi 0, %s34
      %s54 = sphi 0, %s54
      %s56 = sphi 0, %s54
      %s57 = sphi 0, %s56
      %s71 = sphi 0, %s57
      %s75 = sphi 0, %s75
      %s77 = sphi 0, %s75
      %s78 = sphi 0, %s77
      %s92 = sphi 0, %s78
      %s96 = sphi 0, %s96
      %s98 = sphi 0, %s96
      %s99 = sphi 0, %s98
      %s113 = sphi 0, %s99
      %s117 = sphi 0, %s117
      %s119 = sphi 0, %s117
      %s120 = sphi 0, %s119
      %s134 = sphi 0, %s120
      %s138 = sphi 0, %s138
      %s140 = sphi 0, %s138
      %s141 = sphi 0, %s140
      %s155 = sphi 0, %s141
      %s161 = sphi 0, %s163
      %s164 = sphi 0, %s161
      %s165 = sphi 0, %s164
      %s181 = sphi 0, %s165
    $region4: #{tpu_custom_call.1} parent=1 // loop_header_branch
      %23 = sbr.rel (%p21) target = $region8
    $region5: #{tpu_custom_call.1} parent=1 // loop_body
      %s25 = ssub.s32 %s20, 1
      %s26 = ssub.s32 %s20, 2
      %s27 = sadd.s32 %s20, 1
      %s28 = ssub.s32 %s20, %s27
      %p29 = scmp.eq.s32.totalorder %s28, 0
      %s31 = sadd.s32 %s30, 1
      %s32 = scalar_select %p29, %s30, %s31
      %p35 = pneg %p29
      %p36 = scmp.eq.s32.totalorder %s20, 1
      %p37 = por %p35, %p36
      %p38 = scmp.ne.s32.totalorder %s30, %s33
      %p39 = scmp.eq.s32.totalorder %s20, 0
      %p40 = por %p38, %p39
      %p41 = scmp.ne.s32.totalorder %s30, %s33
      %p42 = scmp.eq.s32.totalorder %s25, 1
      %p43 = por %p41, %p42
      %p44 = scmp.ne.s32.totalorder %s33, %s34
      %p45 = scmp.eq.s32.totalorder %s25, 0
      %p46 = por %p44, %p45
      %p47 = scmp.ne.s32.totalorder %s33, %s34
      %p48 = scmp.eq.s32.totalorder %s26, 1
      %p49 = por %p47, %p48
      %p51 = scmp.ne.s32.totalorder %s34, %s50
      %p52 = scmp.eq.s32.totalorder %s26, 0
      %p53 = por %p51, %p52
      %s55 = sadd.s32 %s54, 1
      %p58 = scmp.eq.s32.totalorder %s20, 1
      %p59 = scmp.ne.s32.totalorder %s54, %s56
      %p60 = scmp.eq.s32.totalorder %s20, 0
      %p61 = por %p59, %p60
      %p62 = scmp.ne.s32.totalorder %s54, %s56
      %p63 = scmp.eq.s32.totalorder %s25, 1
      %p64 = por %p62, %p63
      %p65 = scmp.ne.s32.totalorder %s56, %s57
      %p66 = scmp.eq.s32.totalorder %s25, 0
      %p67 = por %p65, %p66
      %p68 = scmp.ne.s32.totalorder %s56, %s57
      %p69 = scmp.eq.s32.totalorder %s26, 1
      %p70 = por %p68, %p69
      %p72 = scmp.ne.s32.totalorder %s57, %s71
      %p73 = scmp.eq.s32.totalorder %s26, 0
      %p74 = por %p72, %p73
      %s76 = sadd.s32 %s75, 1
      %p79 = scmp.eq.s32.totalorder %s20, 1
      %p80 = scmp.ne.s32.totalorder %s75, %s77
      %p81 = scmp.eq.s32.totalorder %s20, 0
      %p82 = por %p80, %p81
      %p83 = scmp.ne.s32.totalorder %s75, %s77
      %p84 = scmp.eq.s32.totalorder %s25, 1
      %p85 = por %p83, %p84
      %p86 = scmp.ne.s32.totalorder %s77, %s78
      %p87 = scmp.eq.s32.totalorder %s25, 0
      %p88 = por %p86, %p87
      %p89 = scmp.ne.s32.totalorder %s77, %s78
      %p90 = scmp.eq.s32.totalorder %s26, 1
      %p91 = por %p89, %p90
      %p93 = scmp.ne.s32.totalorder %s78, %s92
      %p94 = scmp.eq.s32.totalorder %s26, 0
      %p95 = por %p93, %p94
      %s97 = sadd.s32 %s96, 1
      %p100 = scmp.eq.s32.totalorder %s20, 1
      %p101 = scmp.ne.s32.totalorder %s96, %s98
      %p102 = scmp.eq.s32.totalorder %s20, 0
      %p103 = por %p101, %p102
      %p104 = scmp.ne.s32.totalorder %s96, %s98
      %p105 = scmp.eq.s32.totalorder %s25, 1
      %p106 = por %p104, %p105
      %p107 = scmp.ne.s32.totalorder %s98, %s99
      %p108 = scmp.eq.s32.totalorder %s25, 0
      %p109 = por %p107, %p108
      %p110 = scmp.ne.s32.totalorder %s98, %s99
      %p111 = scmp.eq.s32.totalorder %s26, 1
      %p112 = por %p110, %p111
      %p114 = scmp.ne.s32.totalorder %s99, %s113
      %p115 = scmp.eq.s32.totalorder %s26, 0
      %p116 = por %p114, %p115
      %s118 = sadd.s32 %s117, 1
      %p121 = scmp.eq.s32.totalorder %s20, 1
      %p122 = scmp.ne.s32.totalorder %s117, %s119
      %p123 = scmp.eq.s32.totalorder %s20, 0
      %p124 = por %p122, %p123
      %p125 = scmp.ne.s32.totalorder %s117, %s119
      %p126 = scmp.eq.s32.totalorder %s25, 1
      %p127 = por %p125, %p126
      %p128 = scmp.ne.s32.totalorder %s119, %s120
      %p129 = scmp.eq.s32.totalorder %s25, 0
      %p130 = por %p128, %p129
      %p131 = scmp.ne.s32.totalorder %s119, %s120
      %p132 = scmp.eq.s32.totalorder %s26, 1
      %p133 = por %p131, %p132
      %p135 = scmp.ne.s32.totalorder %s120, %s134
      %p136 = scmp.eq.s32.totalorder %s26, 0
      %p137 = por %p135, %p136
      %s139 = sadd.s32 %s138, 1
      %p142 = scmp.eq.s32.totalorder %s20, 1
      %p143 = scmp.ne.s32.totalorder %s138, %s140
      %p144 = scmp.eq.s32.totalorder %s20, 0
      %p145 = por %p143, %p144
      %p146 = scmp.ne.s32.totalorder %s138, %s140
      %p147 = scmp.eq.s32.totalorder %s25, 1
      %p148 = por %p146, %p147
      %p149 = scmp.ne.s32.totalorder %s140, %s141
      %p150 = scmp.eq.s32.totalorder %s25, 0
      %p151 = por %p149, %p150
      %p152 = scmp.ne.s32.totalorder %s140, %s141
      %p153 = scmp.eq.s32.totalorder %s26, 1
      %p154 = por %p152, %p153
      %p156 = scmp.ne.s32.totalorder %s141, %s155
      %p157 = scmp.eq.s32.totalorder %s26, 0
      %p158 = por %p156, %p157
      %s159 = ssub.s32 %s20, %s27
      %p160 = scmp.eq.s32.totalorder %s159, 0
      %s162 = sadd.s32 %s161, 1
      %s163 = scalar_select %p160, %s161, %s162
      %p166 = pneg %p160
      %p167 = scmp.eq.s32.totalorder %s20, 1
      %p168 = por %p166, %p167
      %p169 = scmp.ne.s32.totalorder %s161, %s164
      %p170 = scmp.eq.s32.totalorder %s20, 0
      %p171 = por %p169, %p170
      %p172 = scmp.ne.s32.totalorder %s161, %s164
      %p173 = scmp.eq.s32.totalorder %s25, 1
      %p174 = por %p172, %p173
      %p175 = scmp.ne.s32.totalorder %s164, %s165
      %p176 = scmp.eq.s32.totalorder %s25, 0
      %p177 = por %p175, %p176
      %p178 = scmp.ne.s32.totalorder %s164, %s165
      %p179 = scmp.eq.s32.totalorder %s26, 1
      %p180 = por %p178, %p179
      %p182 = scmp.ne.s32.totalorder %s165, %s181
      %p183 = scmp.eq.s32.totalorder %s26, 0
      %p184 = por %p182, %p183
      %p185 = scmp.le.s32.totalorder 1, %s20
      %p186 = scmp.lt.s32.totalorder %s20, 3
      %p187 = pnand %p185, %p186
      %p188 = pneg %p187
      // Predicated region
      $region9: #{tpu_custom_call.1} parent=5 // pred_check
        _
      $region10: #{tpu_custom_call.1} parent=5 // pred_check_branch
        %190 = sbr.rel (%p187) target = $region12
      $region11: #{tpu_custom_call.1} parent=5 // pred_region
        %s191 = ssub.s32 %s20, 1
        // Predicated region
        $region13: #{tpu_custom_call.1} parent=11 // pred_check
          %p192 = pneg %p67
        $region14: #{tpu_custom_call.1} parent=11 // pred_check_branch
          %194 = sbr.rel (%p192) target = $region16
        $region15: #{tpu_custom_call.1} parent=11 // pred_region
          %s196 = ssub.s32 4096, 4096
          %197 = vsyncadd [#allocation6], %s196
          %s198 = sshll.u32 [#allocation5], 4
          %s199 = int_to_ptr.vmem [resolvable:$true] %s198
          %204 = dma.hbm_to_vmem [thread:$0]  %s1, 4096, %s199, [#allocation6], 128, 128, 8
        $region16: #{tpu_custom_call.1} parent=11 // pred_fallthru
          _
        // Predicated region
        $region17: #{tpu_custom_call.1} parent=11 // pred_check
          %p205 = pneg %p88
        $region18: #{tpu_custom_call.1} parent=11 // pred_check_branch
          %207 = sbr.rel (%p205) target = $region20
        $region19: #{tpu_custom_call.1} parent=11 // pred_region
          %s209 = ssub.s32 2048, 2048
          %210 = vsyncadd [#allocation6], %s209
          %s211 = sshll.u32 [#allocation7], 4
          %s212 = int_to_ptr.vmem [resolvable:$true] %s211
          %217 = dma.hbm_to_vmem [thread:$0]  %s2, 2048, %s212, [#allocation6], 128, 128, 8
        $region20: #{tpu_custom_call.1} parent=11 // pred_fallthru
          _
        // Predicated region
        $region21: #{tpu_custom_call.1} parent=11 // pred_check
          %p218 = pneg %p109
        $region22: #{tpu_custom_call.1} parent=11 // pred_check_branch
          %220 = sbr.rel (%p218) target = $region24
        $region23: #{tpu_custom_call.1} parent=11 // pred_region
          %s222 = ssub.s32 2048, 2048
          %223 = vsyncadd [#allocation9], %s222
          %s224 = sshll.u32 [#allocation8], 4
          %s225 = int_to_ptr.vmem [resolvable:$true] %s224
          %230 = dma.hbm_to_vmem [thread:$0]  %s3, 2048, %s225, [#allocation9], 128, 128, 8
        $region24: #{tpu_custom_call.1} parent=11 // pred_fallthru
          _
        // Predicated region
        $region25: #{tpu_custom_call.1} parent=11 // pred_check
          %p231 = pneg %p130
        $region26: #{tpu_custom_call.1} parent=11 // pred_check_branch
          %233 = sbr.rel (%p231) target = $region28
        $region27: #{tpu_custom_call.1} parent=11 // pred_region
          %s235 = ssub.s32 4096, 4096
          %236 = vsyncadd [#allocation9], %s235
          %s237 = sshll.u32 [#allocation10], 4
          %s238 = int_to_ptr.vmem [resolvable:$true] %s237
          %243 = dma.hbm_to_vmem [thread:$0]  %s4, 4096, %s238, [#allocation9], 256, 256, 16
        $region28: #{tpu_custom_call.1} parent=11 // pred_fallthru
          _
        // Predicated region
        $region29: #{tpu_custom_call.1} parent=11 // pred_check
          %p244 = pneg %p151
        $region30: #{tpu_custom_call.1} parent=11 // pred_check_branch
          %246 = sbr.rel (%p244) target = $region32
        $region31: #{tpu_custom_call.1} parent=11 // pred_region
          _
        $region32: #{tpu_custom_call.1} parent=11 // pred_fallthru
          _
      $region12: #{tpu_custom_call.1} parent=5 // pred_fallthru
        _
      %p247 = scmp.lt.s32.totalorder %s20, 2
      // Predicated region
      $region33: #{tpu_custom_call.1} parent=5 // pred_check
        %p248 = pneg %p247
      $region34: #{tpu_custom_call.1} parent=5 // pred_check_branch
        %250 = sbr.rel (%p248) target = $region36
      $region35: #{tpu_custom_call.1} parent=5 // pred_region
        // Predicated region
        $region37: #{tpu_custom_call.1} parent=35 // pred_check
          %p251 = pneg %p40
        $region38: #{tpu_custom_call.1} parent=35 // pred_check_branch
          %253 = sbr.rel (%p251) target = $region40
        $region39: #{tpu_custom_call.1} parent=35 // pred_region
          %s254 = sand.u32 %s30, 1
          %s255 = scalar_lea.sflag [#allocation3], %s254
          %s256 = sand.u32 %s30, 1
          %s257 = smul.addr %s256, 256
          %s258 = scalar_lea.vmem [#allocation2], %s257
          %s259 = smul.u32 16, %s20
          %s261 = ssub.s32 4096, 4096
          %262 = vsyncadd %s255, %s261
          %s263 = smul.addr %s259, 2
          %s264 = smul.addr %s263, 128
          %s265 = scalar_lea.hbm %s0, %s264
          %s266 = sshll.u32 %s258, 4
          %s267 = int_to_ptr.vmem [resolvable:$true] %s266
          %272 = dma.hbm_to_vmem [thread:$0]  %s265, 4096, %s267, %s255, 256, 256, 16
        $region40: #{tpu_custom_call.1} parent=35 // pred_fallthru
          _
      $region36: #{tpu_custom_call.1} parent=5 // pred_fallthru
        _
      %p273 = scmp.le.s32.totalorder 1, %s20
      %p274 = scmp.lt.s32.totalorder %s20, 3
      %p275 = pnand %p273, %p274
      %p276 = pneg %p275
      // Predicated region
      $region41: #{tpu_custom_call.1} parent=5 // pred_check
        _
      $region42: #{tpu_custom_call.1} parent=5 // pred_check_branch
        %278 = sbr.rel (%p275) target = $region44
      $region43: #{tpu_custom_call.1} parent=5 // pred_region
        %s279 = ssub.s32 %s20, 1
        %s280 = sand.u32 %s33, 1
        %s281 = scalar_lea.sflag [#allocation3], %s280
        %s282 = sand.u32 %s33, 1
        %s283 = smul.addr %s282, 256
        %s284 = scalar_lea.vmem [#allocation2], %s283
        // Predicated region
        $region45: #{tpu_custom_call.1} parent=43 // pred_check
          %p285 = pneg %p46
        $region46: #{tpu_custom_call.1} parent=43 // pred_check_branch
          %287 = sbr.rel (%p285) target = $region48
        $region47: #{tpu_custom_call.1} parent=43 // pred_region
          %288 = dma.done %s281, 4096
        $region48: #{tpu_custom_call.1} parent=43 // pred_fallthru
          _
        // Predicated region
        $region49: #{tpu_custom_call.1} parent=43 // pred_check
          %p289 = pneg %p67
        $region50: #{tpu_custom_call.1} parent=43 // pred_check_branch
          %291 = sbr.rel (%p289) target = $region52
        $region51: #{tpu_custom_call.1} parent=43 // pred_region
          %292 = dma.done [#allocation6], 4096
        $region52: #{tpu_custom_call.1} parent=43 // pred_fallthru
          _
        // Predicated region
        $region53: #{tpu_custom_call.1} parent=43 // pred_check
          %p293 = pneg %p88
        $region54: #{tpu_custom_call.1} parent=43 // pred_check_branch
          %295 = sbr.rel (%p293) target = $region56
        $region55: #{tpu_custom_call.1} parent=43 // pred_region
          %296 = dma.done [#allocation6], 2048
        $region56: #{tpu_custom_call.1} parent=43 // pred_fallthru
          _
        // Predicated region
        $region57: #{tpu_custom_call.1} parent=43 // pred_check
          %p297 = pneg %p109
        $region58: #{tpu_custom_call.1} parent=43 // pred_check_branch
          %299 = sbr.rel (%p297) target = $region60
        $region59: #{tpu_custom_call.1} parent=43 // pred_region
          %300 = dma.done [#allocation9], 2048
        $region60: #{tpu_custom_call.1} parent=43 // pred_fallthru
          _
        // Predicated region
        $region61: #{tpu_custom_call.1} parent=43 // pred_check
          %p301 = pneg %p130
        $region62: #{tpu_custom_call.1} parent=43 // pred_check_branch
          %303 = sbr.rel (%p301) target = $region64
        $region63: #{tpu_custom_call.1} parent=43 // pred_region
          %304 = dma.done [#allocation9], 4096
        $region64: #{tpu_custom_call.1} parent=43 // pred_fallthru
          _
        %s305 = sand.u32 %s33, 1
        %s306 = scalar_lea.sflag [#allocation3], %s305
        %s307 = sand.u32 %s33, 1
        %s308 = smul.addr %s307, 256
        %s309 = scalar_lea.vmem [#allocation2], %s308
        %p310 = pneg %p46
        %p311 = pneg %p43
        %p312 = pneg %p67
        %p313 = pneg %p64
        %p314 = pneg %p88
        %p315 = pneg %p85
        %p316 = pneg %p109
        %p317 = pneg %p106
        %p318 = pneg %p130
        %p319 = pneg %p127
        %p320 = pneg %p151
        %p321 = pneg %p148
        %p322 = pneg %p177
        %p323 = pneg %p174
        %s324 = sand.u32 %s164, 1
        %s325 = scalar_lea.sflag [#allocation4], %s324
        %s326 = sand.u32 %s164, 1
        %s327 = smul.addr %s326, 256
        %s328 = scalar_lea.vmem [#allocation11], %s327
        %s329 = smul.u32 16, %s25
        %s330 = smul.u32 16, %s25
        %v331 = vld [vmem:[%s284] sm:$0xff]
        %v332 = vld [vmem:[%s284 + $0x8] sm:$0xff]
        %v333 = vld [vmem:[%s284 + $0x10] sm:$0xff]
        %v334 = vld [vmem:[%s284 + $0x18] sm:$0xff]
        %v335 = vld [vmem:[%s284 + $0x20] sm:$0xff]
        %v336 = vld [vmem:[%s284 + $0x28] sm:$0xff]
        %v337 = vld [vmem:[%s284 + $0x30] sm:$0xff]
        %v338 = vld [vmem:[%s284 + $0x38] sm:$0xff]
        %v339 = vld [vmem:[%s284 + $0x40] sm:$0xff]
        %v340 = vld [vmem:[%s284 + $0x48] sm:$0xff]
        %v341 = vld [vmem:[%s284 + $0x50] sm:$0xff]
        %v342 = vld [vmem:[%s284 + $0x58] sm:$0xff]
        %v343 = vld [vmem:[%s284 + $0x60] sm:$0xff]
        %v344 = vld [vmem:[%s284 + $0x68] sm:$0xff]
        %v345 = vld [vmem:[%s284 + $0x70] sm:$0xff]
        %v346 = vld [vmem:[%s284 + $0x78] sm:$0xff]
        %v347 = vld [vmem:[%s284 + $0x80] sm:$0xff]
        %v348 = vld [vmem:[%s284 + $0x88] sm:$0xff]
        %v349 = vld [vmem:[%s284 + $0x90] sm:$0xff]
        %v350 = vld [vmem:[%s284 + $0x98] sm:$0xff]
        %v351 = vld [vmem:[%s284 + $0xa0] sm:$0xff]
        %v352 = vld [vmem:[%s284 + $0xa8] sm:$0xff]
        %v353 = vld [vmem:[%s284 + $0xb0] sm:$0xff]
        %v354 = vld [vmem:[%s284 + $0xb8] sm:$0xff]
        %v355 = vld [vmem:[%s284 + $0xc0] sm:$0xff]
        %v356 = vld [vmem:[%s284 + $0xc8] sm:$0xff]
        %v357 = vld [vmem:[%s284 + $0xd0] sm:$0xff]
        %v358 = vld [vmem:[%s284 + $0xd8] sm:$0xff]
        %v359 = vld [vmem:[%s284 + $0xe0] sm:$0xff]
        %v360 = vld [vmem:[%s284 + $0xe8] sm:$0xff]
        %v361 = vld [vmem:[%s284 + $0xf0] sm:$0xff]
        %v362 = vld [vmem:[%s284 + $0xf8] sm:$0xff]
        %v363 = vld [vmem:[#allocation5] sm:$0xff]
        %v364 = vld [vmem:[#allocation5 + $0x8] sm:$0xff]
        %v365 = vld [vmem:[#allocation5 + $0x10] sm:$0xff]
        %v366 = vld [vmem:[#allocation5 + $0x18] sm:$0xff]
        %v367 = vld [vmem:[#allocation5 + $0x20] sm:$0xff]
        %v368 = vld [vmem:[#allocation5 + $0x28] sm:$0xff]
        %v369 = vld [vmem:[#allocation5 + $0x30] sm:$0xff]
        %v370 = vld [vmem:[#allocation5 + $0x38] sm:$0xff]
        %v371 = vld [vmem:[#allocation5 + $0x40] sm:$0xff]
        %v372 = vld [vmem:[#allocation5 + $0x48] sm:$0xff]
        %v373 = vld [vmem:[#allocation5 + $0x50] sm:$0xff]
        %v374 = vld [vmem:[#allocation5 + $0x58] sm:$0xff]
        %v375 = vld [vmem:[#allocation5 + $0x60] sm:$0xff]
        %v376 = vld [vmem:[#allocation5 + $0x68] sm:$0xff]
        %v377 = vld [vmem:[#allocation5 + $0x70] sm:$0xff]
        %v378 = vld [vmem:[#allocation5 + $0x78] sm:$0xff]
        %v379 = vld [vmem:[#allocation5 + $0x80] sm:$0xff]
        %v380 = vld [vmem:[#allocation5 + $0x88] sm:$0xff]
        %v381 = vld [vmem:[#allocation5 + $0x90] sm:$0xff]
        %v382 = vld [vmem:[#allocation5 + $0x98] sm:$0xff]
        %v383 = vld [vmem:[#allocation5 + $0xa0] sm:$0xff]
        %v384 = vld [vmem:[#allocation5 + $0xa8] sm:$0xff]
        %v385 = vld [vmem:[#allocation5 + $0xb0] sm:$0xff]
        %v386 = vld [vmem:[#allocation5 + $0xb8] sm:$0xff]
        %v387 = vld [vmem:[#allocation5 + $0xc0] sm:$0xff]
        %v388 = vld [vmem:[#allocation5 + $0xc8] sm:$0xff]
        %v389 = vld [vmem:[#allocation5 + $0xd0] sm:$0xff]
        %v390 = vld [vmem:[#allocation5 + $0xd8] sm:$0xff]
        %v391 = vld [vmem:[#allocation5 + $0xe0] sm:$0xff]
        %v392 = vld [vmem:[#allocation5 + $0xe8] sm:$0xff]
        %v393 = vld [vmem:[#allocation5 + $0xf0] sm:$0xff]
        %v394 = vld [vmem:[#allocation5 + $0xf8] sm:$0xff]
        %v395 = vld [vmem:[%s5] sm:$0x1]
        %v396 = vlaneseq
        %v397 = vshrl.u32 %v396, 7
        %v398 = vsub.s32 0, %v397
        %v399 = vrot.slane %v395, %v398
        %400 = vmatprep.subr.mxu0 0.0
        %401 = vmatpush1.msra.mxu0 %v363
        %402 = vmatprep.subr.mxu0 0.0
        %403 = vmatpush1.msra.mxu0 %v364
        %404 = vmatprep.subr.mxu0 0.0
        %405 = vmatpush1.msra.mxu0 %v365
        %406 = vmatprep.subr.mxu0 0.0
        %407 = vmatpush1.msra.mxu0 %v366
        %408 = vmatprep.subr.mxu0 0.0
        %409 = vmatpush1.msra.mxu0 %v367
        %410 = vmatprep.subr.mxu0 0.0
        %411 = vmatpush1.msra.mxu0 %v368
        %412 = vmatprep.subr.mxu0 0.0
        %413 = vmatpush1.msra.mxu0 %v369
        %414 = vmatprep.subr.mxu0 0.0
        %415 = vmatpush1.msra.mxu0 %v370
        %416 = vmatprep.subr.mxu0 0.0
        %417 = vmatpush1.msra.mxu0 %v371
        %418 = vmatprep.subr.mxu0 0.0
        %419 = vmatpush1.msra.mxu0 %v372
        %420 = vmatprep.subr.mxu0 0.0
        %421 = vmatpush1.msra.mxu0 %v373
        %422 = vmatprep.subr.mxu0 0.0
        %423 = vmatpush1.msra.mxu0 %v374
        %424 = vmatprep.subr.mxu0 0.0
        %425 = vmatpush1.msra.mxu0 %v375
        %426 = vmatprep.subr.mxu0 0.0
        %427 = vmatpush1.msra.mxu0 %v376
        %428 = vmatprep.subr.mxu0 0.0
        %429 = vmatpush1.msra.mxu0 %v377
        %430 = vmatprep.subr.mxu0 0.0
        %431 = vmatpush1.msra.mxu0 %v378
        %432 = vmatprep.subr.mxu0 0.0
        %433 = vmatpush1.msra.mxu0 %v379
        %434 = vmatprep.subr.mxu0 0.0
        %435 = vmatpush1.msra.mxu0 %v380
        %436 = vmatprep.subr.mxu0 0.0
        %437 = vmatpush1.msra.mxu0 %v381
        %438 = vmatprep.subr.mxu0 0.0
        %439 = vmatpush1.msra.mxu0 %v382
        %440 = vmatprep.subr.mxu0 0.0
        %441 = vmatpush1.msra.mxu0 %v383
        %442 = vmatprep.subr.mxu0 0.0
        %443 = vmatpush1.msra.mxu0 %v384
        %444 = vmatprep.subr.mxu0 0.0
        %445 = vmatpush1.msra.mxu0 %v385
        %446 = vmatprep.subr.mxu0 0.0
        %447 = vmatpush1.msra.mxu0 %v386
        %448 = vmatprep.subr.mxu0 0.0
        %449 = vmatpush1.msra.mxu0 %v387
        %450 = vmatprep.subr.mxu0 0.0
        %451 = vmatpush1.msra.mxu0 %v388
        %452 = vmatprep.subr.mxu0 0.0
        %453 = vmatpush1.msra.mxu0 %v389
        %454 = vmatprep.subr.mxu0 0.0
        %455 = vmatpush1.msra.mxu0 %v390
        %456 = vmatprep.subr.mxu0 0.0
        %457 = vmatpush1.msra.mxu0 %v391
        %458 = vmatprep.subr.mxu0 0.0
        %459 = vmatpush1.msra.mxu0 %v392
        %460 = vmatprep.subr.mxu0 0.0
        %461 = vmatpush1.msra.mxu0 %v393
        %462 = vmatprep.subr.mxu0 0.0
        %463 = vmatpush1.msra.mxu0 %v394
        %464 = vmatprep.mubr.f32.mxu0 %v332
        %465 = vmatmul.mubr.f32.gmra.mrb[0].mxu0 %v331
        %v466 = vpop.f32.mrb[0].mxu0
        %v467 = vadd.f32 %v399, %v466
        %v468 = vpop.f32.mrb[0].mxu0
        %469 = vmatprep.mubr.f32.mxu0 %v334
        %470 = vmatmul.mubr.f32.gmra.mrb[0].mxu0 %v333
        %v471 = vpop.f32.mrb[0].mxu0
        %v472 = vadd.f32 %v399, %v471
        %v473 = vpop.f32.mrb[0].mxu0
        %474 = vmatprep.mubr.f32.mxu0 %v336
        %475 = vmatmul.mubr.f32.gmra.mrb[0].mxu0 %v335
        %v476 = vpop.f32.mrb[0].mxu0
        %v477 = vadd.f32 %v399, %v476
        %v478 = vpop.f32.mrb[0].mxu0
        %479 = vmatprep.mubr.f32.mxu0 %v338
        %480 = vmatmul.mubr.f32.gmra.mrb[0].mxu0 %v337
        %v481 = vpop.f32.mrb[0].mxu0
        %v482 = vadd.f32 %v399, %v481
        %v483 = vpop.f32.mrb[0].mxu0
        %484 = vmatprep.mubr.f32.mxu0 %v340
        %485 = vmatmul.mubr.f32.gmra.mrb[0].mxu0 %v339
        %v486 = vpop.f32.mrb[0].mxu0
        %v487 = vadd.f32 %v399, %v486
        %v488 = vpop.f32.mrb[0].mxu0
        %489 = vmatprep.mubr.f32.mxu0 %v342
        %490 = vmatmul.mubr.f32.gmra.mrb[0].mxu0 %v341
        %v491 = vpop.f32.mrb[0].mxu0
        %v492 = vadd.f32 %v399, %v491
        %v493 = vpop.f32.mrb[0].mxu0
        %494 = vmatprep.mubr.f32.mxu0 %v344
        %495 = vmatmul.mubr.f32.gmra.mrb[0].mxu0 %v343
        %v496 = vpop.f32.mrb[0].mxu0
        %v497 = vadd.f32 %v399, %v496
        %v498 = vpop.f32.mrb[0].mxu0
        %499 = vmatprep.mubr.f32.mxu0 %v346
        %500 = vmatmul.mubr.f32.gmra.mrb[0].mxu0 %v345
        %v501 = vpop.f32.mrb[0].mxu0
        %v502 = vadd.f32 %v399, %v501
        %v503 = vpop.f32.mrb[0].mxu0
        %504 = vmatprep.mubr.f32.mxu0 %v348
        %505 = vmatmul.mubr.f32.gmra.mrb[0].mxu0 %v347
        %v506 = vpop.f32.mrb[0].mxu0
        %v507 = vadd.f32 %v399, %v506
        %v508 = vpop.f32.mrb[0].mxu0
        %509 = vmatprep.mubr.f32.mxu0 %v350
        %510 = vmatmul.mubr.f32.gmra.mrb[0].mxu0 %v349
        %v511 = vpop.f32.mrb[0].mxu0
        %v512 = vadd.f32 %v399, %v511
        %v513 = vpop.f32.mrb[0].mxu0
        %514 = vmatprep.mubr.f32.mxu0 %v352
        %515 = vmatmul.mubr.f32.gmra.mrb[0].mxu0 %v351
        %v516 = vpop.f32.mrb[0].mxu0
        %v517 = vadd.f32 %v399, %v516
        %v518 = vpop.f32.mrb[0].mxu0
        %519 = vmatprep.mubr.f32.mxu0 %v354
        %520 = vmatmul.mubr.f32.gmra.mrb[0].mxu0 %v353
        %v521 = vpop.f32.mrb[0].mxu0
        %v522 = vadd.f32 %v399, %v521
        %v523 = vpop.f32.mrb[0].mxu0
        %524 = vmatprep.mubr.f32.mxu0 %v356
        %525 = vmatmul.mubr.f32.gmra.mrb[0].mxu0 %v355
        %v526 = vpop.f32.mrb[0].mxu0
        %v527 = vadd.f32 %v399, %v526
        %v528 = vpop.f32.mrb[0].mxu0
        %529 = vmatprep.mubr.f32.mxu0 %v358
        %530 = vmatmul.mubr.f32.gmra.mrb[0].mxu0 %v357
        %v531 = vpop.f32.mrb[0].mxu0
        %v532 = vadd.f32 %v399, %v531
        %v533 = vpop.f32.mrb[0].mxu0
        %534 = vmatprep.mubr.f32.mxu0 %v360
        %535 = vmatmul.mubr.f32.gmra.mrb[0].mxu0 %v359
        %v536 = vpop.f32.mrb[0].mxu0
        %v537 = vadd.f32 %v399, %v536
        %v538 = vpop.f32.mrb[0].mxu0
        %539 = vmatprep.mubr.f32.mxu0 %v362
        %540 = vmatmul.mubr.f32.gmra.mrb[0].mxu0 %v361
        %v541 = vpop.f32.mrb[0].mxu0
        %v542 = vadd.f32 %v399, %v541
        %v543 = vpop.f32.mrb[0].mxu0
        %544 = vdwg.mxu0
        %v545 = vmax.f32 %v467, 0.0
        %v546 = vmax.f32 %v472, 0.0
        %v547 = vmax.f32 %v477, 0.0
        %v548 = vmax.f32 %v482, 0.0
        %v549 = vmax.f32 %v487, 0.0
        %v550 = vmax.f32 %v492, 0.0
        %v551 = vmax.f32 %v497, 0.0
        %v552 = vmax.f32 %v502, 0.0
        %v553 = vmax.f32 %v507, 0.0
        %v554 = vmax.f32 %v512, 0.0
        %v555 = vmax.f32 %v517, 0.0
        %v556 = vmax.f32 %v522, 0.0
        %v557 = vmax.f32 %v527, 0.0
        %v558 = vmax.f32 %v532, 0.0
        %v559 = vmax.f32 %v537, 0.0
        %v560 = vmax.f32 %v542, 0.0
        %v561 = vld [vmem:[#allocation7] sm:$0xff]
        %v562 = vld [vmem:[#allocation7 + $0x8] sm:$0xff]
        %v563 = vld [vmem:[#allocation7 + $0x10] sm:$0xff]
        %v564 = vld [vmem:[#allocation7 + $0x18] sm:$0xff]
        %v565 = vld [vmem:[#allocation7 + $0x20] sm:$0xff]
        %v566 = vld [vmem:[#allocation7 + $0x28] sm:$0xff]
        %v567 = vld [vmem:[#allocation7 + $0x30] sm:$0xff]
        %v568 = vld [vmem:[#allocation7 + $0x38] sm:$0xff]
        %v569 = vld [vmem:[#allocation7 + $0x40] sm:$0xff]
        %v570 = vld [vmem:[#allocation7 + $0x48] sm:$0xff]
        %v571 = vld [vmem:[#allocation7 + $0x50] sm:$0xff]
        %v572 = vld [vmem:[#allocation7 + $0x58] sm:$0xff]
        %v573 = vld [vmem:[#allocation7 + $0x60] sm:$0xff]
        %v574 = vld [vmem:[#allocation7 + $0x68] sm:$0xff]
        %v575 = vld [vmem:[#allocation7 + $0x70] sm:$0xff]
        %v576 = vld [vmem:[#allocation7 + $0x78] sm:$0xff]
        %v577 = vld [vmem:[%s5 + $0x1] sm:$0x1]
        %v578 = vlaneseq
        %v579 = vshrl.u32 %v578, 7
        %v580 = vsub.s32 0, %v579
        %v581 = vrot.slane %v577, %v580
        %582 = vmatprep.subr.mxu0 0.0
        %583 = vmatpush1.msra.mxu0 %v561
        %584 = vmatprep.subr.mxu0 0.0
        %585 = vmatpush1.msra.mxu0 %v562
        %586 = vmatprep.subr.mxu0 0.0
        %587 = vmatpush1.msra.mxu0 %v563
        %588 = vmatprep.subr.mxu0 0.0
        %589 = vmatpush1.msra.mxu0 %v564
        %590 = vmatprep.subr.mxu0 0.0
        %591 = vmatpush1.msra.mxu0 %v565
        %592 = vmatprep.subr.mxu0 0.0
        %593 = vmatpush1.msra.mxu0 %v566
        %594 = vmatprep.subr.mxu0 0.0
        %595 = vmatpush1.msra.mxu0 %v567
        %596 = vmatprep.subr.mxu0 0.0
        %597 = vmatpush1.msra.mxu0 %v568
        %598 = vmatprep.subr.mxu0 0.0
        %599 = vmatpush1.msra.mxu0 %v569
        %600 = vmatprep.subr.mxu0 0.0
        %601 = vmatpush1.msra.mxu0 %v570
        %602 = vmatprep.subr.mxu0 0.0
        %603 = vmatpush1.msra.mxu0 %v571
        %604 = vmatprep.subr.mxu0 0.0
        %605 = vmatpush1.msra.mxu0 %v572
        %606 = vmatprep.subr.mxu0 0.0
        %607 = vmatpush1.msra.mxu0 %v573
        %608 = vmatprep.subr.mxu0 0.0
        %609 = vmatpush1.msra.mxu0 %v574
        %610 = vmatprep.subr.mxu0 0.0
        %611 = vmatpush1.msra.mxu0 %v575
        %612 = vmatprep.subr.mxu0 0.0
        %613 = vmatpush1.msra.mxu0 %v576
        %614 = vmatprep.subr.mxu0 0.0
        %615 = vmatpush1.msra.mxu0 0.0
        %616 = vmatprep.subr.mxu0 0.0
        %617 = vmatpush1.msra.mxu0 0.0
        %618 = vmatprep.subr.mxu0 0.0
        %619 = vmatpush1.msra.mxu0 0.0
        %620 = vmatprep.subr.mxu0 0.0
        %621 = vmatpush1.msra.mxu0 0.0
        %622 = vmatprep.subr.mxu0 0.0
        %623 = vmatpush1.msra.mxu0 0.0
        %624 = vmatprep.subr.mxu0 0.0
        %625 = vmatpush1.msra.mxu0 0.0
        %626 = vmatprep.subr.mxu0 0.0
        %627 = vmatpush1.msra.mxu0 0.0
        %628 = vmatprep.subr.mxu0 0.0
        %629 = vmatpush1.msra.mxu0 0.0
        %630 = vmatprep.subr.mxu0 0.0
        %631 = vmatpush1.msra.mxu0 0.0
        %632 = vmatprep.subr.mxu0 0.0
        %633 = vmatpush1.msra.mxu0 0.0
        %634 = vmatprep.subr.mxu0 0.0
        %635 = vmatpush1.msra.mxu0 0.0
        %636 = vmatprep.subr.mxu0 0.0
        %637 = vmatpush1.msra.mxu0 0.0
        %638 = vmatprep.subr.mxu0 0.0
        %639 = vmatpush1.msra.mxu0 0.0
        %640 = vmatprep.subr.mxu0 0.0
        %641 = vmatpush1.msra.mxu0 0.0
        %642 = vmatprep.subr.mxu0 0.0
        %643 = vmatpush1.msra.mxu0 0.0
        %644 = vmatprep.subr.mxu0 0.0
        %645 = vmatpush1.msra.mxu0 0.0
        %646 = vmatprep.mubr.f32.mxu0 0.0
        %647 = vmatmul.mubr.f32.gmra.mrb[0].mxu0 %v545
        %v648 = vpop.f32.mrb[0].mxu0
        %v649 = vadd.f32 %v581, %v648
        %v650 = vpop.f32.mrb[0].mxu0
        %651 = vmatprep.mubr.f32.mxu0 0.0
        %652 = vmatmul.mubr.f32.gmra.mrb[0].mxu0 %v546
        %v653 = vpop.f32.mrb[0].mxu0
        %v654 = vadd.f32 %v581, %v653
        %v655 = vpop.f32.mrb[0].mxu0
        %656 = vmatprep.mubr.f32.mxu0 0.0
        %657 = vmatmul.mubr.f32.gmra.mrb[0].mxu0 %v547
        %v658 = vpop.f32.mrb[0].mxu0
        %v659 = vadd.f32 %v581, %v658
        %v660 = vpop.f32.mrb[0].mxu0
        %661 = vmatprep.mubr.f32.mxu0 0.0
        %662 = vmatmul.mubr.f32.gmra.mrb[0].mxu0 %v548
        %v663 = vpop.f32.mrb[0].mxu0
        %v664 = vadd.f32 %v581, %v663
        %v665 = vpop.f32.mrb[0].mxu0
        %666 = vmatprep.mubr.f32.mxu0 0.0
        %667 = vmatmul.mubr.f32.gmra.mrb[0].mxu0 %v549
        %v668 = vpop.f32.mrb[0].mxu0
        %v669 = vadd.f32 %v581, %v668
        %v670 = vpop.f32.mrb[0].mxu0
        %671 = vmatprep.mubr.f32.mxu0 0.0
        %672 = vmatmul.mubr.f32.gmra.mrb[0].mxu0 %v550
        %v673 = vpop.f32.mrb[0].mxu0
        %v674 = vadd.f32 %v581, %v673
        %v675 = vpop.f32.mrb[0].mxu0
        %676 = vmatprep.mubr.f32.mxu0 0.0
        %677 = vmatmul.mubr.f32.gmra.mrb[0].mxu0 %v551
        %v678 = vpop.f32.mrb[0].mxu0
        %v679 = vadd.f32 %v581, %v678
        %v680 = vpop.f32.mrb[0].mxu0
        %681 = vmatprep.mubr.f32.mxu0 0.0
        %682 = vmatmul.mubr.f32.gmra.mrb[0].mxu0 %v552
        %v683 = vpop.f32.mrb[0].mxu0
        %v684 = vadd.f32 %v581, %v683
        %v685 = vpop.f32.mrb[0].mxu0
        %686 = vmatprep.mubr.f32.mxu0 0.0
        %687 = vmatmul.mubr.f32.gmra.mrb[0].mxu0 %v553
        %v688 = vpop.f32.mrb[0].mxu0
        %v689 = vadd.f32 %v581, %v688
        %v690 = vpop.f32.mrb[0].mxu0
        %691 = vmatprep.mubr.f32.mxu0 0.0
        %692 = vmatmul.mubr.f32.gmra.mrb[0].mxu0 %v554
        %v693 = vpop.f32.mrb[0].mxu0
        %v694 = vadd.f32 %v581, %v693
        %v695 = vpop.f32.mrb[0].mxu0
        %696 = vmatprep.mubr.f32.mxu0 0.0
        %697 = vmatmul.mubr.f32.gmra.mrb[0].mxu0 %v555
        %v698 = vpop.f32.mrb[0].mxu0
        %v699 = vadd.f32 %v581, %v698
        %v700 = vpop.f32.mrb[0].mxu0
        %701 = vmatprep.mubr.f32.mxu0 0.0
        %702 = vmatmul.mubr.f32.gmra.mrb[0].mxu0 %v556
        %v703 = vpop.f32.mrb[0].mxu0
        %v704 = vadd.f32 %v581, %v703
        %v705 = vpop.f32.mrb[0].mxu0
        %706 = vmatprep.mubr.f32.mxu0 0.0
        %707 = vmatmul.mubr.f32.gmra.mrb[0].mxu0 %v557
        %v708 = vpop.f32.mrb[0].mxu0
        %v709 = vadd.f32 %v581, %v708
        %v710 = vpop.f32.mrb[0].mxu0
        %711 = vmatprep.mubr.f32.mxu0 0.0
        %712 = vmatmul.mubr.f32.gmra.mrb[0].mxu0 %v558
        %v713 = vpop.f32.mrb[0].mxu0
        %v714 = vadd.f32 %v581, %v713
        %v715 = vpop.f32.mrb[0].mxu0
        %716 = vmatprep.mubr.f32.mxu0 0.0
        %717 = vmatmul.mubr.f32.gmra.mrb[0].mxu0 %v559
        %v718 = vpop.f32.mrb[0].mxu0
        %v719 = vadd.f32 %v581, %v718
        %v720 = vpop.f32.mrb[0].mxu0
        %721 = vmatprep.mubr.f32.mxu0 0.0
        %722 = vmatmul.mubr.f32.gmra.mrb[0].mxu0 %v560
        %v723 = vpop.f32.mrb[0].mxu0
        %v724 = vadd.f32 %v581, %v723
        %v725 = vpop.f32.mrb[0].mxu0
        %726 = vdwg.mxu0
        %v727 = vld [vmem:[#allocation8] sm:$0xff]
        %v728 = vld [vmem:[#allocation8 + $0x8] sm:$0xff]
        %v729 = vld [vmem:[#allocation8 + $0x10] sm:$0xff]
        %v730 = vld [vmem:[#allocation8 + $0x18] sm:$0xff]
        %v731 = vld [vmem:[#allocation8 + $0x20] sm:$0xff]
        %v732 = vld [vmem:[#allocation8 + $0x28] sm:$0xff]
        %v733 = vld [vmem:[#allocation8 + $0x30] sm:$0xff]
        %v734 = vld [vmem:[#allocation8 + $0x38] sm:$0xff]
        %v735 = vld [vmem:[#allocation8 + $0x40] sm:$0xff]
        %v736 = vld [vmem:[#allocation8 + $0x48] sm:$0xff]
        %v737 = vld [vmem:[#allocation8 + $0x50] sm:$0xff]
        %v738 = vld [vmem:[#allocation8 + $0x58] sm:$0xff]
        %v739 = vld [vmem:[#allocation8 + $0x60] sm:$0xff]
        %v740 = vld [vmem:[#allocation8 + $0x68] sm:$0xff]
        %v741 = vld [vmem:[#allocation8 + $0x70] sm:$0xff]
        %v742 = vld [vmem:[#allocation8 + $0x78] sm:$0xff]
        %v743 = vld [vmem:[%s5 + $0x2] sm:$0x1]
        %v744 = vlaneseq
        %v745 = vshrl.u32 %v744, 7
        %v746 = vsub.s32 0, %v745
        %v747 = vrot.slane %v743, %v746
        %748 = vmatprep.subr.mxu0 0.0
        %749 = vmatpush1.msra.mxu0 %v727
        %750 = vmatprep.subr.mxu0 0.0
        %751 = vmatpush1.msra.mxu0 %v728
        %752 = vmatprep.subr.mxu0 0.0
        %753 = vmatpush1.msra.mxu0 %v729
        %754 = vmatprep.subr.mxu0 0.0
        %755 = vmatpush1.msra.mxu0 %v730
        %756 = vmatprep.subr.mxu0 0.0
        %757 = vmatpush1.msra.mxu0 %v731
        %758 = vmatprep.subr.mxu0 0.0
        %759 = vmatpush1.msra.mxu0 %v732
        %760 = vmatprep.subr.mxu0 0.0
        %761 = vmatpush1.msra.mxu0 %v733
        %762 = vmatprep.subr.mxu0 0.0
        %763 = vmatpush1.msra.mxu0 %v734
        %764 = vmatprep.subr.mxu0 0.0
        %765 = vmatpush1.msra.mxu0 %v735
        %766 = vmatprep.subr.mxu0 0.0
        %767 = vmatpush1.msra.mxu0 %v736
        %768 = vmatprep.subr.mxu0 0.0
        %769 = vmatpush1.msra.mxu0 %v737
        %770 = vmatprep.subr.mxu0 0.0
        %771 = vmatpush1.msra.mxu0 %v738
        %772 = vmatprep.subr.mxu0 0.0
        %773 = vmatpush1.msra.mxu0 %v739
        %774 = vmatprep.subr.mxu0 0.0
        %775 = vmatpush1.msra.mxu0 %v740
        %776 = vmatprep.subr.mxu0 0.0
        %777 = vmatpush1.msra.mxu0 %v741
        %778 = vmatprep.subr.mxu0 0.0
        %779 = vmatpush1.msra.mxu0 %v742
        %780 = vmatprep.subr.mxu0 0.0
        %781 = vmatpush1.msra.mxu0 0.0
        %782 = vmatprep.subr.mxu0 0.0
        %783 = vmatpush1.msra.mxu0 0.0
        %784 = vmatprep.subr.mxu0 0.0
        %785 = vmatpush1.msra.mxu0 0.0
        %786 = vmatprep.subr.mxu0 0.0
        %787 = vmatpush1.msra.mxu0 0.0
        %788 = vmatprep.subr.mxu0 0.0
        %789 = vmatpush1.msra.mxu0 0.0
        %790 = vmatprep.subr.mxu0 0.0
        %791 = vmatpush1.msra.mxu0 0.0
        %792 = vmatprep.subr.mxu0 0.0
        %793 = vmatpush1.msra.mxu0 0.0
        %794 = vmatprep.subr.mxu0 0.0
        %795 = vmatpush1.msra.mxu0 0.0
        %796 = vmatprep.subr.mxu0 0.0
        %797 = vmatpush1.msra.mxu0 0.0
        %798 = vmatprep.subr.mxu0 0.0
        %799 = vmatpush1.msra.mxu0 0.0
        %800 = vmatprep.subr.mxu0 0.0
        %801 = vmatpush1.msra.mxu0 0.0
        %802 = vmatprep.subr.mxu0 0.0
        %803 = vmatpush1.msra.mxu0 0.0
        %804 = vmatprep.subr.mxu0 0.0
        %805 = vmatpush1.msra.mxu0 0.0
        %806 = vmatprep.subr.mxu0 0.0
        %807 = vmatpush1.msra.mxu0 0.0
        %808 = vmatprep.subr.mxu0 0.0
        %809 = vmatpush1.msra.mxu0 0.0
        %810 = vmatprep.subr.mxu0 0.0
        %811 = vmatpush1.msra.mxu0 0.0
        %812 = vmatprep.mubr.f32.mxu0 0.0
        %813 = vmatmul.mubr.f32.gmra.mrb[0].mxu0 %v649
        %v814 = vpop.f32.mrb[0].mxu0
        %v815 = vadd.f32 %v747, %v814
        %v816 = vpop.f32.mrb[0].mxu0
        %817 = vmatprep.mubr.f32.mxu0 0.0
        %818 = vmatmul.mubr.f32.gmra.mrb[0].mxu0 %v654
        %v819 = vpop.f32.mrb[0].mxu0
        %v820 = vadd.f32 %v747, %v819
        %v821 = vpop.f32.mrb[0].mxu0
        %822 = vmatprep.mubr.f32.mxu0 0.0
        %823 = vmatmul.mubr.f32.gmra.mrb[0].mxu0 %v659
        %v824 = vpop.f32.mrb[0].mxu0
        %v825 = vadd.f32 %v747, %v824
        %v826 = vpop.f32.mrb[0].mxu0
        %827 = vmatprep.mubr.f32.mxu0 0.0
        %828 = vmatmul.mubr.f32.gmra.mrb[0].mxu0 %v664
        %v829 = vpop.f32.mrb[0].mxu0
        %v830 = vadd.f32 %v747, %v829
        %v831 = vpop.f32.mrb[0].mxu0
        %832 = vmatprep.mubr.f32.mxu0 0.0
        %833 = vmatmul.mubr.f32.gmra.mrb[0].mxu0 %v669
        %v834 = vpop.f32.mrb[0].mxu0
        %v835 = vadd.f32 %v747, %v834
        %v836 = vpop.f32.mrb[0].mxu0
        %837 = vmatprep.mubr.f32.mxu0 0.0
        %838 = vmatmul.mubr.f32.gmra.mrb[0].mxu0 %v674
        %v839 = vpop.f32.mrb[0].mxu0
        %v840 = vadd.f32 %v747, %v839
        %v841 = vpop.f32.mrb[0].mxu0
        %842 = vmatprep.mubr.f32.mxu0 0.0
        %843 = vmatmul.mubr.f32.gmra.mrb[0].mxu0 %v679
        %v844 = vpop.f32.mrb[0].mxu0
        %v845 = vadd.f32 %v747, %v844
        %v846 = vpop.f32.mrb[0].mxu0
        %847 = vmatprep.mubr.f32.mxu0 0.0
        %848 = vmatmul.mubr.f32.gmra.mrb[0].mxu0 %v684
        %v849 = vpop.f32.mrb[0].mxu0
        %v850 = vadd.f32 %v747, %v849
        %v851 = vpop.f32.mrb[0].mxu0
        %852 = vmatprep.mubr.f32.mxu0 0.0
        %853 = vmatmul.mubr.f32.gmra.mrb[0].mxu0 %v689
        %v854 = vpop.f32.mrb[0].mxu0
        %v855 = vadd.f32 %v747, %v854
        %v856 = vpop.f32.mrb[0].mxu0
        %857 = vmatprep.mubr.f32.mxu0 0.0
        %858 = vmatmul.mubr.f32.gmra.mrb[0].mxu0 %v694
        %v859 = vpop.f32.mrb[0].mxu0
        %v860 = vadd.f32 %v747, %v859
        %v861 = vpop.f32.mrb[0].mxu0
        %862 = vmatprep.mubr.f32.mxu0 0.0
        %863 = vmatmul.mubr.f32.gmra.mrb[0].mxu0 %v699
        %v864 = vpop.f32.mrb[0].mxu0
        %v865 = vadd.f32 %v747, %v864
        %v866 = vpop.f32.mrb[0].mxu0
        %867 = vmatprep.mubr.f32.mxu0 0.0
        %868 = vmatmul.mubr.f32.gmra.mrb[0].mxu0 %v704
        %v869 = vpop.f32.mrb[0].mxu0
        %v870 = vadd.f32 %v747, %v869
        %v871 = vpop.f32.mrb[0].mxu0
        %872 = vmatprep.mubr.f32.mxu0 0.0
        %873 = vmatmul.mubr.f32.gmra.mrb[0].mxu0 %v709
        %v874 = vpop.f32.mrb[0].mxu0
        %v875 = vadd.f32 %v747, %v874
        %v876 = vpop.f32.mrb[0].mxu0
        %877 = vmatprep.mubr.f32.mxu0 0.0
        %878 = vmatmul.mubr.f32.gmra.mrb[0].mxu0 %v714
        %v879 = vpop.f32.mrb[0].mxu0
        %v880 = vadd.f32 %v747, %v879
        %v881 = vpop.f32.mrb[0].mxu0
        %882 = vmatprep.mubr.f32.mxu0 0.0
        %883 = vmatmul.mubr.f32.gmra.mrb[0].mxu0 %v719
        %v884 = vpop.f32.mrb[0].mxu0
        %v885 = vadd.f32 %v747, %v884
        %v886 = vpop.f32.mrb[0].mxu0
        %887 = vmatprep.mubr.f32.mxu0 0.0
        %888 = vmatmul.mubr.f32.gmra.mrb[0].mxu0 %v724
        %v889 = vpop.f32.mrb[0].mxu0
        %v890 = vadd.f32 %v747, %v889
        %v891 = vpop.f32.mrb[0].mxu0
        %892 = vdwg.mxu0
        %v893 = vmax.f32 %v815, 0.0
        %v894 = vmax.f32 %v820, 0.0
        %v895 = vmax.f32 %v825, 0.0
        %v896 = vmax.f32 %v830, 0.0
        %v897 = vmax.f32 %v835, 0.0
        %v898 = vmax.f32 %v840, 0.0
        %v899 = vmax.f32 %v845, 0.0
        %v900 = vmax.f32 %v850, 0.0
        %v901 = vmax.f32 %v855, 0.0
        %v902 = vmax.f32 %v860, 0.0
        %v903 = vmax.f32 %v865, 0.0
        %v904 = vmax.f32 %v870, 0.0
        %v905 = vmax.f32 %v875, 0.0
        %v906 = vmax.f32 %v880, 0.0
        %v907 = vmax.f32 %v885, 0.0
        %v908 = vmax.f32 %v890, 0.0
        %v909 = vld [vmem:[#allocation10] sm:$0xff]
        %v910 = vld [vmem:[#allocation10 + $0x8] sm:$0xff]
        %v911 = vld [vmem:[#allocation10 + $0x10] sm:$0xff]
        %v912 = vld [vmem:[#allocation10 + $0x18] sm:$0xff]
        %v913 = vld [vmem:[#allocation10 + $0x20] sm:$0xff]
        %v914 = vld [vmem:[#allocation10 + $0x28] sm:$0xff]
        %v915 = vld [vmem:[#allocation10 + $0x30] sm:$0xff]
        %v916 = vld [vmem:[#allocation10 + $0x38] sm:$0xff]
        %v917 = vld [vmem:[#allocation10 + $0x40] sm:$0xff]
        %v918 = vld [vmem:[#allocation10 + $0x48] sm:$0xff]
        %v919 = vld [vmem:[#allocation10 + $0x50] sm:$0xff]
        %v920 = vld [vmem:[#allocation10 + $0x58] sm:$0xff]
        %v921 = vld [vmem:[#allocation10 + $0x60] sm:$0xff]
        %v922 = vld [vmem:[#allocation10 + $0x68] sm:$0xff]
        %v923 = vld [vmem:[#allocation10 + $0x70] sm:$0xff]
        %v924 = vld [vmem:[#allocation10 + $0x78] sm:$0xff]
        %v925 = vld [vmem:[#allocation10 + $0x80] sm:$0xff]
        %v926 = vld [vmem:[#allocation10 + $0x88] sm:$0xff]
        %v927 = vld [vmem:[#allocation10 + $0x90] sm:$0xff]
        %v928 = vld [vmem:[#allocation10 + $0x98] sm:$0xff]
        %v929 = vld [vmem:[#allocation10 + $0xa0] sm:$0xff]
        %v930 = vld [vmem:[#allocation10 + $0xa8] sm:$0xff]
        %v931 = vld [vmem:[#allocation10 + $0xb0] sm:$0xff]
        %v932 = vld [vmem:[#allocation10 + $0xb8] sm:$0xff]
        %v933 = vld [vmem:[#allocation10 + $0xc0] sm:$0xff]
        %v934 = vld [vmem:[#allocation10 + $0xc8] sm:$0xff]
        %v935 = vld [vmem:[#allocation10 + $0xd0] sm:$0xff]
        %v936 = vld [vmem:[#allocation10 + $0xd8] sm:$0xff]
        %v937 = vld [vmem:[#allocation10 + $0xe0] sm:$0xff]
        %v938 = vld [vmem:[#allocation10 + $0xe8] sm:$0xff]
        %v939 = vld [vmem:[#allocation10 + $0xf0] sm:$0xff]
        %v940 = vld [vmem:[#allocation10 + $0xf8] sm:$0xff]
        %s941 = scalar_lea.vmem %s5, 3
        %v942 = vld [vmem:[%s941] ss:$4 sm:$0x3]
        %v944 = vlaneseq
        %v945 = vshrl.u32 %v944, 7
        %v946 = vsub.s32 0, %v945
        %v947 = vrot.slane %v942, %v946
        %v948 = vlaneseq
        %v949 = vshrl.u32 %v948, 7
        %v950 = vsub.s32 1, %v949
        %v951 = vrot.slane %v942, %v950
        %954 = vmatprep.subr.mxu0 %v910
        %955 = vmatpush1.msra.mxu0 %v909
        %956 = vmatprep.subr.mxu0 %v912
        %957 = vmatpush1.msra.mxu0 %v911
        %958 = vmatprep.subr.mxu0 %v914
        %959 = vmatpush1.msra.mxu0 %v913
        %960 = vmatprep.subr.mxu0 %v916
        %961 = vmatpush1.msra.mxu0 %v915
        %962 = vmatprep.subr.mxu0 %v918
        %963 = vmatpush1.msra.mxu0 %v917
        %964 = vmatprep.subr.mxu0 %v920
        %965 = vmatpush1.msra.mxu0 %v919
        %966 = vmatprep.subr.mxu0 %v922
        %967 = vmatpush1.msra.mxu0 %v921
        %968 = vmatprep.subr.mxu0 %v924
        %969 = vmatpush1.msra.mxu0 %v923
        %970 = vmatprep.subr.mxu0 %v926
        %971 = vmatpush1.msra.mxu0 %v925
        %972 = vmatprep.subr.mxu0 %v928
        %973 = vmatpush1.msra.mxu0 %v927
        %974 = vmatprep.subr.mxu0 %v930
        %975 = vmatpush1.msra.mxu0 %v929
        %976 = vmatprep.subr.mxu0 %v932
        %977 = vmatpush1.msra.mxu0 %v931
        %978 = vmatprep.subr.mxu0 %v934
        %979 = vmatpush1.msra.mxu0 %v933
        %980 = vmatprep.subr.mxu0 %v936
        %981 = vmatpush1.msra.mxu0 %v935
        %982 = vmatprep.subr.mxu0 %v938
        %983 = vmatpush1.msra.mxu0 %v937
        %984 = vmatprep.subr.mxu0 %v940
        %985 = vmatpush1.msra.mxu0 %v939
        %986 = vmatprep.subr.mxu0 0.0
        %987 = vmatpush1.msra.mxu0 0.0
        %988 = vmatprep.subr.mxu0 0.0
        %989 = vmatpush1.msra.mxu0 0.0
        %990 = vmatprep.subr.mxu0 0.0
        %991 = vmatpush1.msra.mxu0 0.0
        %992 = vmatprep.subr.mxu0 0.0
        %993 = vmatpush1.msra.mxu0 0.0
        %994 = vmatprep.subr.mxu0 0.0
        %995 = vmatpush1.msra.mxu0 0.0
        %996 = vmatprep.subr.mxu0 0.0
        %997 = vmatpush1.msra.mxu0 0.0
        %998 = vmatprep.subr.mxu0 0.0
        %999 = vmatpush1.msra.mxu0 0.0
        %1000 = vmatprep.subr.mxu0 0.0
        %1001 = vmatpush1.msra.mxu0 0.0
        %1002 = vmatprep.subr.mxu0 0.0
        %1003 = vmatpush1.msra.mxu0 0.0
        %1004 = vmatprep.subr.mxu0 0.0
        %1005 = vmatpush1.msra.mxu0 0.0
        %1006 = vmatprep.subr.mxu0 0.0
        %1007 = vmatpush1.msra.mxu0 0.0
        %1008 = vmatprep.subr.mxu0 0.0
        %1009 = vmatpush1.msra.mxu0 0.0
        %1010 = vmatprep.subr.mxu0 0.0
        %1011 = vmatpush1.msra.mxu0 0.0
        %1012 = vmatprep.subr.mxu0 0.0
        %1013 = vmatpush1.msra.mxu0 0.0
        %1014 = vmatprep.subr.mxu0 0.0
        %1015 = vmatpush1.msra.mxu0 0.0
        %1016 = vmatprep.subr.mxu0 0.0
        %1017 = vmatpush1.msra.mxu0 0.0
        %1018 = vmatprep.mubr.f32.mxu0 0.0
        %1019 = vmatmul.mubr.f32.gmra.mrb[0].mxu0 %v893
        %v1020 = vpop.f32.mrb[0].mxu0
        %v1021 = vadd.f32 %v947, %v1020
        %v1022 = vpop.f32.mrb[0].mxu0
        %v1023 = vadd.f32 %v951, %v1022
        %1024 = vmatprep.mubr.f32.mxu0 0.0
        %1025 = vmatmul.mubr.f32.gmra.mrb[0].mxu0 %v894
        %v1026 = vpop.f32.mrb[0].mxu0
        %v1027 = vadd.f32 %v947, %v1026
        %v1028 = vpop.f32.mrb[0].mxu0
        %v1029 = vadd.f32 %v951, %v1028
        %1030 = vmatprep.mubr.f32.mxu0 0.0
        %1031 = vmatmul.mubr.f32.gmra.mrb[0].mxu0 %v895
        %v1032 = vpop.f32.mrb[0].mxu0
        %v1033 = vadd.f32 %v947, %v1032
        %v1034 = vpop.f32.mrb[0].mxu0
        %v1035 = vadd.f32 %v951, %v1034
        %1036 = vmatprep.mubr.f32.mxu0 0.0
        %1037 = vmatmul.mubr.f32.gmra.mrb[0].mxu0 %v896
        %v1038 = vpop.f32.mrb[0].mxu0
        %v1039 = vadd.f32 %v947, %v1038
        %v1040 = vpop.f32.mrb[0].mxu0
        %v1041 = vadd.f32 %v951, %v1040
        %1042 = vmatprep.mubr.f32.mxu0 0.0
        %1043 = vmatmul.mubr.f32.gmra.mrb[0].mxu0 %v897
        %v1044 = vpop.f32.mrb[0].mxu0
        %v1045 = vadd.f32 %v947, %v1044
        %v1046 = vpop.f32.mrb[0].mxu0
        %v1047 = vadd.f32 %v951, %v1046
        %1048 = vmatprep.mubr.f32.mxu0 0.0
        %1049 = vmatmul.mubr.f32.gmra.mrb[0].mxu0 %v898
        %v1050 = vpop.f32.mrb[0].mxu0
        %v1051 = vadd.f32 %v947, %v1050
        %v1052 = vpop.f32.mrb[0].mxu0
        %v1053 = vadd.f32 %v951, %v1052
        %1054 = vmatprep.mubr.f32.mxu0 0.0
        %1055 = vmatmul.mubr.f32.gmra.mrb[0].mxu0 %v899
        %v1056 = vpop.f32.mrb[0].mxu0
        %v1057 = vadd.f32 %v947, %v1056
        %v1058 = vpop.f32.mrb[0].mxu0
        %v1059 = vadd.f32 %v951, %v1058
        %1060 = vmatprep.mubr.f32.mxu0 0.0
        %1061 = vmatmul.mubr.f32.gmra.mrb[0].mxu0 %v900
        %v1062 = vpop.f32.mrb[0].mxu0
        %v1063 = vadd.f32 %v947, %v1062
        %v1064 = vpop.f32.mrb[0].mxu0
        %v1065 = vadd.f32 %v951, %v1064
        %1066 = vmatprep.mubr.f32.mxu0 0.0
        %1067 = vmatmul.mubr.f32.gmra.mrb[0].mxu0 %v901
        %v1068 = vpop.f32.mrb[0].mxu0
        %v1069 = vadd.f32 %v947, %v1068
        %v1070 = vpop.f32.mrb[0].mxu0
        %v1071 = vadd.f32 %v951, %v1070
        %1072 = vmatprep.mubr.f32.mxu0 0.0
        %1073 = vmatmul.mubr.f32.gmra.mrb[0].mxu0 %v902
        %v1074 = vpop.f32.mrb[0].mxu0
        %v1075 = vadd.f32 %v947, %v1074
        %v1076 = vpop.f32.mrb[0].mxu0
        %v1077 = vadd.f32 %v951, %v1076
        %1078 = vmatprep.mubr.f32.mxu0 0.0
        %1079 = vmatmul.mubr.f32.gmra.mrb[0].mxu0 %v903
        %v1080 = vpop.f32.mrb[0].mxu0
        %v1081 = vadd.f32 %v947, %v1080
        %v1082 = vpop.f32.mrb[0].mxu0
        %v1083 = vadd.f32 %v951, %v1082
        %1084 = vmatprep.mubr.f32.mxu0 0.0
        %1085 = vmatmul.mubr.f32.gmra.mrb[0].mxu0 %v904
        %v1086 = vpop.f32.mrb[0].mxu0
        %v1087 = vadd.f32 %v947, %v1086
        %v1088 = vpop.f32.mrb[0].mxu0
        %v1089 = vadd.f32 %v951, %v1088
        %1090 = vmatprep.mubr.f32.mxu0 0.0
        %1091 = vmatmul.mubr.f32.gmra.mrb[0].mxu0 %v905
        %v1092 = vpop.f32.mrb[0].mxu0
        %v1093 = vadd.f32 %v947, %v1092
        %v1094 = vpop.f32.mrb[0].mxu0
        %v1095 = vadd.f32 %v951, %v1094
        %1096 = vmatprep.mubr.f32.mxu0 0.0
        %1097 = vmatmul.mubr.f32.gmra.mrb[0].mxu0 %v906
        %v1098 = vpop.f32.mrb[0].mxu0
        %v1099 = vadd.f32 %v947, %v1098
        %v1100 = vpop.f32.mrb[0].mxu0
        %v1101 = vadd.f32 %v951, %v1100
        %1102 = vmatprep.mubr.f32.mxu0 0.0
        %1103 = vmatmul.mubr.f32.gmra.mrb[0].mxu0 %v907
        %v1104 = vpop.f32.mrb[0].mxu0
        %v1105 = vadd.f32 %v947, %v1104
        %v1106 = vpop.f32.mrb[0].mxu0
        %v1107 = vadd.f32 %v951, %v1106
        %1108 = vmatprep.mubr.f32.mxu0 0.0
        %1109 = vmatmul.mubr.f32.gmra.mrb[0].mxu0 %v908
        %v1110 = vpop.f32.mrb[0].mxu0
        %v1111 = vadd.f32 %v947, %v1110
        %v1112 = vpop.f32.mrb[0].mxu0
        %v1113 = vadd.f32 %v951, %v1112
        %1114 = vdwg.mxu0
        %1115 = vst [vmem:[%s328] sm:$0xff] %v1021
        %1116 = vst [vmem:[%s328 + $0x8] sm:$0xff] %v1023
        %1117 = vst [vmem:[%s328 + $0x10] sm:$0xff] %v1027
        %1118 = vst [vmem:[%s328 + $0x18] sm:$0xff] %v1029
        %1119 = vst [vmem:[%s328 + $0x20] sm:$0xff] %v1033
        %1120 = vst [vmem:[%s328 + $0x28] sm:$0xff] %v1035
        %1121 = vst [vmem:[%s328 + $0x30] sm:$0xff] %v1039
        %1122 = vst [vmem:[%s328 + $0x38] sm:$0xff] %v1041
        %1123 = vst [vmem:[%s328 + $0x40] sm:$0xff] %v1045
        %1124 = vst [vmem:[%s328 + $0x48] sm:$0xff] %v1047
        %1125 = vst [vmem:[%s328 + $0x50] sm:$0xff] %v1051
        %1126 = vst [vmem:[%s328 + $0x58] sm:$0xff] %v1053
        %1127 = vst [vmem:[%s328 + $0x60] sm:$0xff] %v1057
        %1128 = vst [vmem:[%s328 + $0x68] sm:$0xff] %v1059
        %1129 = vst [vmem:[%s328 + $0x70] sm:$0xff] %v1063
        %1130 = vst [vmem:[%s328 + $0x78] sm:$0xff] %v1065
        %1131 = vst [vmem:[%s328 + $0x80] sm:$0xff] %v1069
        %1132 = vst [vmem:[%s328 + $0x88] sm:$0xff] %v1071
        %1133 = vst [vmem:[%s328 + $0x90] sm:$0xff] %v1075
        %1134 = vst [vmem:[%s328 + $0x98] sm:$0xff] %v1077
        %1135 = vst [vmem:[%s328 + $0xa0] sm:$0xff] %v1081
        %1136 = vst [vmem:[%s328 + $0xa8] sm:$0xff] %v1083
        %1137 = vst [vmem:[%s328 + $0xb0] sm:$0xff] %v1087
        %1138 = vst [vmem:[%s328 + $0xb8] sm:$0xff] %v1089
        %1139 = vst [vmem:[%s328 + $0xc0] sm:$0xff] %v1093
        %1140 = vst [vmem:[%s328 + $0xc8] sm:$0xff] %v1095
        %1141 = vst [vmem:[%s328 + $0xd0] sm:$0xff] %v1099
        %1142 = vst [vmem:[%s328 + $0xd8] sm:$0xff] %v1101
        %1143 = vst [vmem:[%s328 + $0xe0] sm:$0xff] %v1105
        %1144 = vst [vmem:[%s328 + $0xe8] sm:$0xff] %v1107
        %1145 = vst [vmem:[%s328 + $0xf0] sm:$0xff] %v1111
        %1146 = vst [vmem:[%s328 + $0xf8] sm:$0xff] %v1113
        %s1147 = sand.u32 %s164, 1
        %s1148 = scalar_lea.sflag [#allocation4], %s1147
        %s1149 = sand.u32 %s164, 1
        %s1150 = smul.addr %s1149, 256
        %s1151 = scalar_lea.vmem [#allocation11], %s1150
        // Predicated region
        $region65: #{tpu_custom_call.1} parent=43 // pred_check
          %p1152 = pneg %p174
        $region66: #{tpu_custom_call.1} parent=43 // pred_check_branch
          %1154 = sbr.rel (%p1152) target = $region68
        $region67: #{tpu_custom_call.1} parent=43 // pred_region
          %s1155 = smul.u32 16, %s25
          %s1157 = ssub.s32 4096, 4096
          %1158 = vsyncadd %s1148, %s1157
          %s1159 = smul.addr %s1155, 2
          %s1160 = smul.addr %s1159, 128
          %s1161 = scalar_lea.hbm %s6, %s1160
          %s1162 = sshll.u32 %s1151, 4
          %s1163 = int_to_ptr.vmem [resolvable:$true] %s1162
          %1168 = dma.vmem_to_hbm [thread:$0]  %s1163, 4096, %s1161, %s1148, 256, 256, 16
        $region68: #{tpu_custom_call.1} parent=43 // pred_fallthru
          _
      $region44: #{tpu_custom_call.1} parent=5 // pred_fallthru
        _
      %p1169 = scmp.le.s32.totalorder 2, %s20
      // Predicated region
      $region69: #{tpu_custom_call.1} parent=5 // pred_check
        %p1170 = pneg %p1169
      $region70: #{tpu_custom_call.1} parent=5 // pred_check_branch
        %1172 = sbr.rel (%p1170) target = $region72
      $region71: #{tpu_custom_call.1} parent=5 // pred_region
        %s1173 = ssub.s32 %s20, 2
        // Predicated region
        $region73: #{tpu_custom_call.1} parent=71 // pred_check
          %p1174 = pneg %p180
        $region74: #{tpu_custom_call.1} parent=71 // pred_check_branch
          %1176 = sbr.rel (%p1174) target = $region76
        $region75: #{tpu_custom_call.1} parent=71 // pred_region
          %s1177 = sand.u32 %s165, 1
          %s1178 = scalar_lea.sflag [#allocation4], %s1177
          %s1179 = sand.u32 %s165, 1
          %s1180 = smul.addr %s1179, 256
          %s1181 = scalar_lea.vmem [#allocation11], %s1180
          %1182 = dma.done %s1178, 4096
        $region76: #{tpu_custom_call.1} parent=71 // pred_fallthru
          _
      $region72: #{tpu_custom_call.1} parent=5 // pred_fallthru
        _
    $region6: #{tpu_custom_call.1} parent=1 // loop_footer
      %s24 = sadd.s32 1, %s20
    $region7: #{tpu_custom_call.1} parent=1 // loop_footer_branch
      %19 = sbr.rel target = $region3
    $region8: #{tpu_custom_call.1} parent=1 // loop_exit
      _
    %1183 = vsyncpa [#allocation3], 1
    %s1184 = scalar_lea.sflag [#allocation3], 1
    %1185 = vsyncpa %s1184, 1
    %1186 = vsyncpa [#allocation6], 1
    %1187 = vsyncpa [#allocation9], 1
    %1188 = vsyncpa [#allocation4], 1
    %s1189 = scalar_lea.sflag [#allocation4], 1
    %1190 = vsyncpa %s1189, 1

// kernel: tpu_custom_call.1
$region0: #{tpu_custom_call.1}
  #allocation0 [shape = 'u32[]', space=smem, size = 0x4, offset = 0x4, fixed_abs, tag = 'smem constant byte address 0x4 - core index']
  #allocation1 [shape = 'u32[144,128]{1,0:T(1,128)}', space=vmem, size = 0x12000, scoped, tag = 'internal scratch']
  %s0 = inlined_call_operand.hbm [shape: f32[256,256], index: 0, kind: input, shape index: {}]
  %s1 = inlined_call_operand.hbm [shape: f32[256,128], index: 1, kind: input, shape index: {}]
  %s2 = inlined_call_operand.hbm [shape: f32[128,128], index: 2, kind: input, shape index: {}]
  %s3 = inlined_call_operand.hbm [shape: f32[128,128], index: 3, kind: input, shape index: {}]
  %s4 = inlined_call_operand.hbm [shape: f32[128,256], index: 4, kind: input, shape index: {}]
  %s5 = inlined_call_operand.vmem [shape: f32[4,256], index: 5, kind: input, shape index: {}]
  %s6 = inlined_call_operand.hbm [shape: f32[256,256], index: 6, kind: output, shape index: {}]
  %s7 = sld [smem:[#allocation0]]
  $region77: #{tpu_custom_call.1} parent=0
    _
  %s9 = ssub.s32 1, %s7
  %s10 = scalar_select 0, %s9, %s7
  $region1: #{tpu_custom_call.1} parent=0
    #allocation2 [shape = 'u8[262144]{0}', space=vmem, size = 0x40000, scoped, tag = 'input window, operand 0']
    #allocation3 [shape = 's32[2]{0}', space=sflag, size = 0x8, scoped, tag = 'scoped memory for tpu_custom_call.1']
    #allocation4 [shape = 's32[2]{0}', space=sflag, size = 0x8, scoped, tag = 'scoped memory for tpu_custom_call.1']
    #allocation5 [shape = 'u8[131072]{0}', space=vmem, size = 0x20000, scoped, tag = 'input window, operand 1, single buffered']
    #allocation6 [shape = 's32[1]{0}', space=sflag, size = 0x4, scoped, tag = 'scoped memory for tpu_custom_call.1']
    #allocation7 [shape = 'u8[65536]{0}', space=vmem, size = 0x10000, scoped, tag = 'input window, operand 2, single buffered']
    #allocation8 [shape = 'u8[65536]{0}', space=vmem, size = 0x10000, scoped, tag = 'input window, operand 3, single buffered']
    #allocation9 [shape = 's32[1]{0}', space=sflag, size = 0x4, scoped, tag = 'scoped memory for tpu_custom_call.1']
    #allocation10 [shape = 'u8[131072]{0}', space=vmem, size = 0x20000, scoped, tag = 'input window, operand 4, single buffered']
    #allocation11 [shape = 'u8[262144]{0}', space=vmem, size = 0x40000, scoped, tag = 'output window, operand 0']
    %11 = vsyncpa [#allocation3], 0
    %s12 = scalar_lea.sflag [#allocation3], 1
    %13 = vsyncpa %s12, 0
    %14 = vsyncpa [#allocation6], 0
    %15 = vsyncpa [#allocation9], 0
    %16 = vsyncpa [#allocation4], 0
    %s17 = scalar_lea.sflag [#allocation4], 1
    %18 = vsyncpa %s17, 0
    loop: start=0, step=1, limit=4
    $region2: #{tpu_custom_call.1} parent=1 // loop_pre_header
      _
    $region3: #{tpu_custom_call.1} parent=1 // loop_header
      %s20 = sphi 0, %s24
      %p21 = scmp.ge.s32.totalorder %s20, 4
      %s30 = sphi 0, %s32
      %s33 = sphi 0, %s30
      %s34 = sphi 0, %s33
      %s50 = sphi 0, %s34
      %s54 = sphi 0, %s54
      %s56 = sphi 0, %s54
      %s57 = sphi 0, %s56
      %s71 = sphi 0, %s57
      %s75 = sphi 0, %s75
      %s77 = sphi 0, %s75
      %s78 = sphi 0, %s77
      %s92 = sphi 0, %s78
      %s96 = sphi 0, %s96
      %s98 = sphi 0, %s96
      %s99 = sphi 0, %s98
      %s113 = sphi 0, %s99
      %s117 = sphi 0, %s117
      %s119 = sphi 0, %s117
      %s120 = sphi 0, %s119
      %s134 = sphi 0, %s120
      %s138 = sphi 0, %s138
      %s140 = sphi 0, %s138
      %s141 = sphi 0, %s140
      %s155 = sphi 0, %s141
      %s161 = sphi 0, %s163
      %s164 = sphi 0, %s161
      %s165 = sphi 0, %s164
      %s181 = sphi 0, %s165
    $region4: #{tpu_custom_call.1} parent=1 // loop_header_branch
      %23 = sbr.rel (%p21) target = $region8
    $region5: #{tpu_custom_call.1} parent=1 // loop_body
      %s25 = ssub.s32 %s20, 1
      %s26 = ssub.s32 %s20, 2
      %s27 = sadd.s32 %s20, 1
      %s28 = ssub.s32 %s20, %s27
      %p29 = scmp.eq.s32.totalorder %s28, 0
      %s31 = sadd.s32 %s30, 1
      %s32 = scalar_select %p29, %s30, %s31
      %p35 = pneg %p29
      %p36 = scmp.eq.s32.totalorder %s20, 1
      %p37 = por %p35, %p36
      %p38 = scmp.ne.s32.totalorder %s30, %s33
      %p39 = scmp.eq.s32.totalorder %s20, 0
      %p40 = por %p38, %p39
      %p41 = scmp.ne.s32.totalorder %s30, %s33
      %p42 = scmp.eq.s32.totalorder %s25, 1
      %p43 = por %p41, %p42
      %p44 = scmp.ne.s32.totalorder %s33, %s34
      %p45 = scmp.eq.s32.totalorder %s25, 0
      %p46 = por %p44, %p45
      %p47 = scmp.ne.s32.totalorder %s33, %s34
      %p48 = scmp.eq.s32.totalorder %s26, 1
      %p49 = por %p47, %p48
      %p51 = scmp.ne.s32.totalorder %s34, %s50
      %p52 = scmp.eq.s32.totalorder %s26, 0
      %p53 = por %p51, %p52
      %s55 = sadd.s32 %s54, 1
      %p58 = scmp.eq.s32.totalorder %s20, 1
      %p59 = scmp.ne.s32.totalorder %s54, %s56
      %p60 = scmp.eq.s32.totalorder %s20, 0
      %p61 = por %p59, %p60
      %p62 = scmp.ne.s32.totalorder %s54, %s56
      %p63 = scmp.eq.s32.totalorder %s25, 1
      %p64 = por %p62, %p63
      %p65 = scmp.ne.s32.totalorder %s56, %s57
      %p66 = scmp.eq.s32.totalorder %s25, 0
      %p67 = por %p65, %p66
      %p68 = scmp.ne.s32.totalorder %s56, %s57
      %p69 = scmp.eq.s32.totalorder %s26, 1
      %p70 = por %p68, %p69
      %p72 = scmp.ne.s32.totalorder %s57, %s71
      %p73 = scmp.eq.s32.totalorder %s26, 0
      %p74 = por %p72, %p73
      %s76 = sadd.s32 %s75, 1
      %p79 = scmp.eq.s32.totalorder %s20, 1
      %p80 = scmp.ne.s32.totalorder %s75, %s77
      %p81 = scmp.eq.s32.totalorder %s20, 0
      %p82 = por %p80, %p81
      %p83 = scmp.ne.s32.totalorder %s75, %s77
      %p84 = scmp.eq.s32.totalorder %s25, 1
      %p85 = por %p83, %p84
      %p86 = scmp.ne.s32.totalorder %s77, %s78
      %p87 = scmp.eq.s32.totalorder %s25, 0
      %p88 = por %p86, %p87
      %p89 = scmp.ne.s32.totalorder %s77, %s78
      %p90 = scmp.eq.s32.totalorder %s26, 1
      %p91 = por %p89, %p90
      %p93 = scmp.ne.s32.totalorder %s78, %s92
      %p94 = scmp.eq.s32.totalorder %s26, 0
      %p95 = por %p93, %p94
      %s97 = sadd.s32 %s96, 1
      %p100 = scmp.eq.s32.totalorder %s20, 1
      %p101 = scmp.ne.s32.totalorder %s96, %s98
      %p102 = scmp.eq.s32.totalorder %s20, 0
      %p103 = por %p101, %p102
      %p104 = scmp.ne.s32.totalorder %s96, %s98
      %p105 = scmp.eq.s32.totalorder %s25, 1
      %p106 = por %p104, %p105
      %p107 = scmp.ne.s32.totalorder %s98, %s99
      %p108 = scmp.eq.s32.totalorder %s25, 0
      %p109 = por %p107, %p108
      %p110 = scmp.ne.s32.totalorder %s98, %s99
      %p111 = scmp.eq.s32.totalorder %s26, 1
      %p112 = por %p110, %p111
      %p114 = scmp.ne.s32.totalorder %s99, %s113
      %p115 = scmp.eq.s32.totalorder %s26, 0
      %p116 = por %p114, %p115
      %s118 = sadd.s32 %s117, 1
      %p121 = scmp.eq.s32.totalorder %s20, 1
      %p122 = scmp.ne.s32.totalorder %s117, %s119
      %p123 = scmp.eq.s32.totalorder %s20, 0
      %p124 = por %p122, %p123
      %p125 = scmp.ne.s32.totalorder %s117, %s119
      %p126 = scmp.eq.s32.totalorder %s25, 1
      %p127 = por %p125, %p126
      %p128 = scmp.ne.s32.totalorder %s119, %s120
      %p129 = scmp.eq.s32.totalorder %s25, 0
      %p130 = por %p128, %p129
      %p131 = scmp.ne.s32.totalorder %s119, %s120
      %p132 = scmp.eq.s32.totalorder %s26, 1
      %p133 = por %p131, %p132
      %p135 = scmp.ne.s32.totalorder %s120, %s134
      %p136 = scmp.eq.s32.totalorder %s26, 0
      %p137 = por %p135, %p136
      %s139 = sadd.s32 %s138, 1
      %p142 = scmp.eq.s32.totalorder %s20, 1
      %p143 = scmp.ne.s32.totalorder %s138, %s140
      %p144 = scmp.eq.s32.totalorder %s20, 0
      %p145 = por %p143, %p144
      %p146 = scmp.ne.s32.totalorder %s138, %s140
      %p147 = scmp.eq.s32.totalorder %s25, 1
      %p148 = por %p146, %p147
      %p149 = scmp.ne.s32.totalorder %s140, %s141
      %p150 = scmp.eq.s32.totalorder %s25, 0
      %p151 = por %p149, %p150
      %p152 = scmp.ne.s32.totalorder %s140, %s141
      %p153 = scmp.eq.s32.totalorder %s26, 1
      %p154 = por %p152, %p153
      %p156 = scmp.ne.s32.totalorder %s141, %s155
      %p157 = scmp.eq.s32.totalorder %s26, 0
      %p158 = por %p156, %p157
      %s159 = ssub.s32 %s20, %s27
      %p160 = scmp.eq.s32.totalorder %s159, 0
      %s162 = sadd.s32 %s161, 1
      %s163 = scalar_select %p160, %s161, %s162
      %p166 = pneg %p160
      %p167 = scmp.eq.s32.totalorder %s20, 1
      %p168 = por %p166, %p167
      %p169 = scmp.ne.s32.totalorder %s161, %s164
      %p170 = scmp.eq.s32.totalorder %s20, 0
      %p171 = por %p169, %p170
      %p172 = scmp.ne.s32.totalorder %s161, %s164
      %p173 = scmp.eq.s32.totalorder %s25, 1
      %p174 = por %p172, %p173
      %p175 = scmp.ne.s32.totalorder %s164, %s165
      %p176 = scmp.eq.s32.totalorder %s25, 0
      %p177 = por %p175, %p176
      %p178 = scmp.ne.s32.totalorder %s164, %s165
      %p179 = scmp.eq.s32.totalorder %s26, 1
      %p180 = por %p178, %p179
      %p182 = scmp.ne.s32.totalorder %s165, %s181
      %p183 = scmp.eq.s32.totalorder %s26, 0
      %p184 = por %p182, %p183
      %p185 = scmp.le.s32.totalorder 1, %s20
      %p186 = scmp.lt.s32.totalorder %s20, 3
      %p187 = pnand %p185, %p186
      %p188 = pneg %p187
      // Predicated region
      $region9: #{tpu_custom_call.1} parent=5 // pred_check
        _
      $region10: #{tpu_custom_call.1} parent=5 // pred_check_branch
        %190 = sbr.rel (%p187) target = $region12
      $region11: #{tpu_custom_call.1} parent=5 // pred_region
        %s191 = ssub.s32 %s20, 1
        // Predicated region
        $region13: #{tpu_custom_call.1} parent=11 // pred_check
          %p192 = pneg %p67
        $region14: #{tpu_custom_call.1} parent=11 // pred_check_branch
          %194 = sbr.rel (%p192) target = $region16
        $region15: #{tpu_custom_call.1} parent=11 // pred_region
          %s196 = ssub.s32 4096, 4096
          %197 = vsyncadd [#allocation6], %s196
          %s198 = sshll.u32 [#allocation5], 4
          %s199 = int_to_ptr.vmem [resolvable:$true] %s198
          %204 = dma.hbm_to_vmem [thread:$0]  %s1, 4096, %s199, [#allocation6], 128, 128, 8
        $region16: #{tpu_custom_call.1} parent=11 // pred_fallthru
          _
        // Predicated region
        $region17: #{tpu_custom_call.1} parent=11 // pred_check
          %p205 = pneg %p88
        $region18: #{tpu_custom_call.1} parent=11 // pred_check_branch
          %207 = sbr.rel (%p205) target = $region20
        $region19: #{tpu_custom_call.1} parent=11 // pred_region
          %s209 = ssub.s32 2048, 2048
          %210 = vsyncadd [#allocation6], %s209
          %s211 = sshll.u32 [#allocation7], 4
          %s212 = int_to_ptr.vmem [resolvable:$true] %s211
          %217 = dma.hbm_to_vmem [thread:$0]  %s2, 2048, %s212, [#allocation6], 128, 128, 8
        $region20: #{tpu_custom_call.1} parent=11 // pred_fallthru
          _
        // Predicated region
        $region21: #{tpu_custom_call.1} parent=11 // pred_check
          %p218 = pneg %p109
        $region22: #{tpu_custom_call.1} parent=11 // pred_check_branch
          %220 = sbr.rel (%p218) target = $region24
        $region23: #{tpu_custom_call.1} parent=11 // pred_region
          %s222 = ssub.s32 2048, 2048
          %223 = vsyncadd [#allocation9], %s222
          %s224 = sshll.u32 [#allocation8], 4
          %s225 = int_to_ptr.vmem [resolvable:$true] %s224
          %230 = dma.hbm_to_vmem [thread:$0]  %s3, 2048, %s225, [#allocation9], 128, 128, 8
        $region24: #{tpu_custom_call.1} parent=11 // pred_fallthru
          _
        // Predicated region
        $region25: #{tpu_custom_call.1} parent=11 // pred_check
          %p231 = pneg %p130
        $region26: #{tpu_custom_call.1} parent=11 // pred_check_branch
          %233 = sbr.rel (%p231) target = $region28
        $region27: #{tpu_custom_call.1} parent=11 // pred_region
          %s235 = ssub.s32 4096, 4096
          %236 = vsyncadd [#allocation9], %s235
          %s237 = sshll.u32 [#allocation10], 4
          %s238 = int_to_ptr.vmem [resolvable:$true] %s237
          %243 = dma.hbm_to_vmem [thread:$0]  %s4, 4096, %s238, [#allocation9], 256, 256, 16
        $region28: #{tpu_custom_call.1} parent=11 // pred_fallthru
          _
        // Predicated region
        $region29: #{tpu_custom_call.1} parent=11 // pred_check
          %p244 = pneg %p151
        $region30: #{tpu_custom_call.1} parent=11 // pred_check_branch
          %246 = sbr.rel (%p244) target = $region32
        $region31: #{tpu_custom_call.1} parent=11 // pred_region
          _
        $region32: #{tpu_custom_call.1} parent=11 // pred_fallthru
          _
      $region12: #{tpu_custom_call.1} parent=5 // pred_fallthru
        _
      %p247 = scmp.lt.s32.totalorder %s20, 2
      // Predicated region
      $region33: #{tpu_custom_call.1} parent=5 // pred_check
        %p248 = pneg %p247
      $region34: #{tpu_custom_call.1} parent=5 // pred_check_branch
        %250 = sbr.rel (%p248) target = $region36
      $region35: #{tpu_custom_call.1} parent=5 // pred_region
        // Predicated region
        $region37: #{tpu_custom_call.1} parent=35 // pred_check
          %p251 = pneg %p40
        $region38: #{tpu_custom_call.1} parent=35 // pred_check_branch
          %253 = sbr.rel (%p251) target = $region40
        $region39: #{tpu_custom_call.1} parent=35 // pred_region
          %s254 = sand.u32 %s30, 1
          %s255 = scalar_lea.sflag [#allocation3], %s254
          %s256 = sand.u32 %s30, 1
          %s257 = smul.addr %s256, 256
          %s258 = scalar_lea.vmem [#allocation2], %s257
          %s259 = smul.u32 16, %s20
          %s261 = ssub.s32 4096, 4096
          %262 = vsyncadd %s255, %s261
          %s263 = smul.addr %s259, 2
          %s264 = smul.addr %s263, 128
          %s265 = scalar_lea.hbm %s0, %s264
          %s266 = sshll.u32 %s258, 4
          %s267 = int_to_ptr.vmem [resolvable:$true] %s266
          %272 = dma.hbm_to_vmem [thread:$0]  %s265, 4096, %s267, %s255, 256, 256, 16
        $region40: #{tpu_custom_call.1} parent=35 // pred_fallthru
          _
      $region36: #{tpu_custom_call.1} parent=5 // pred_fallthru
        _
      %p273 = scmp.le.s32.totalorder 1, %s20
      %p274 = scmp.lt.s32.totalorder %s20, 3
      %p275 = pnand %p273, %p274
      %p276 = pneg %p275
      // Predicated region
      $region41: #{tpu_custom_call.1} parent=5 // pred_check
        _
      $region42: #{tpu_custom_call.1} parent=5 // pred_check_branch
        %278 = sbr.rel (%p275) target = $region44
      $region43: #{tpu_custom_call.1} parent=5 // pred_region
        %s279 = ssub.s32 %s20, 1
        %s280 = sand.u32 %s33, 1
        %s281 = scalar_lea.sflag [#allocation3], %s280
        %s282 = sand.u32 %s33, 1
        %s283 = smul.addr %s282, 256
        %s284 = scalar_lea.vmem [#allocation2], %s283
        // Predicated region
        $region45: #{tpu_custom_call.1} parent=43 // pred_check
          %p285 = pneg %p46
        $region46: #{tpu_custom_call.1} parent=43 // pred_check_branch
          %287 = sbr.rel (%p285) target = $region48
        $region47: #{tpu_custom_call.1} parent=43 // pred_region
          %288 = dma.done %s281, 4096
        $region48: #{tpu_custom_call.1} parent=43 // pred_fallthru
          _
        // Predicated region
        $region49: #{tpu_custom_call.1} parent=43 // pred_check
          %p289 = pneg %p67
        $region50: #{tpu_custom_call.1} parent=43 // pred_check_branch
          %291 = sbr.rel (%p289) target = $region52
        $region51: #{tpu_custom_call.1} parent=43 // pred_region
          %292 = dma.done [#allocation6], 4096
        $region52: #{tpu_custom_call.1} parent=43 // pred_fallthru
          _
        // Predicated region
        $region53: #{tpu_custom_call.1} parent=43 // pred_check
          %p293 = pneg %p88
        $region54: #{tpu_custom_call.1} parent=43 // pred_check_branch
          %295 = sbr.rel (%p293) target = $region56
        $region55: #{tpu_custom_call.1} parent=43 // pred_region
          %296 = dma.done [#allocation6], 2048
        $region56: #{tpu_custom_call.1} parent=43 // pred_fallthru
          _
        // Predicated region
        $region57: #{tpu_custom_call.1} parent=43 // pred_check
          %p297 = pneg %p109
        $region58: #{tpu_custom_call.1} parent=43 // pred_check_branch
          %299 = sbr.rel (%p297) target = $region60
        $region59: #{tpu_custom_call.1} parent=43 // pred_region
          %300 = dma.done [#allocation9], 2048
        $region60: #{tpu_custom_call.1} parent=43 // pred_fallthru
          _
        // Predicated region
        $region61: #{tpu_custom_call.1} parent=43 // pred_check
          %p301 = pneg %p130
        $region62: #{tpu_custom_call.1} parent=43 // pred_check_branch
          %303 = sbr.rel (%p301) target = $region64
        $region63: #{tpu_custom_call.1} parent=43 // pred_region
          %304 = dma.done [#allocation9], 4096
        $region64: #{tpu_custom_call.1} parent=43 // pred_fallthru
          _
        %s305 = sand.u32 %s33, 1
        %s306 = scalar_lea.sflag [#allocation3], %s305
        %s307 = sand.u32 %s33, 1
        %s308 = smul.addr %s307, 256
        %s309 = scalar_lea.vmem [#allocation2], %s308
        %p310 = pneg %p46
        %p311 = pneg %p43
        %p312 = pneg %p67
        %p313 = pneg %p64
        %p314 = pneg %p88
        %p315 = pneg %p85
        %p316 = pneg %p109
        %p317 = pneg %p106
        %p318 = pneg %p130
        %p319 = pneg %p127
        %p320 = pneg %p151
        %p321 = pneg %p148
        %p322 = pneg %p177
        %p323 = pneg %p174
        %s324 = sand.u32 %s164, 1
        %s325 = scalar_lea.sflag [#allocation4], %s324
        %s326 = sand.u32 %s164, 1
        %s327 = smul.addr %s326, 256
        %s328 = scalar_lea.vmem [#allocation11], %s327
        %s329 = smul.u32 16, %s25
        %s330 = smul.u32 16, %s25
        %v331 = vld [vmem:[%s284] sm:$0xff]
        %v332 = vld [vmem:[%s284 + $0x8] sm:$0xff]
        %v333 = vld [vmem:[%s284 + $0x10] sm:$0xff]
        %v334 = vld [vmem:[%s284 + $0x18] sm:$0xff]
        %v335 = vld [vmem:[%s284 + $0x20] sm:$0xff]
        %v336 = vld [vmem:[%s284 + $0x28] sm:$0xff]
        %v337 = vld [vmem:[%s284 + $0x30] sm:$0xff]
        %v338 = vld [vmem:[%s284 + $0x38] sm:$0xff]
        %v339 = vld [vmem:[%s284 + $0x40] sm:$0xff]
        %v340 = vld [vmem:[%s284 + $0x48] sm:$0xff]
        %v341 = vld [vmem:[%s284 + $0x50] sm:$0xff]
        %v342 = vld [vmem:[%s284 + $0x58] sm:$0xff]
        %v343 = vld [vmem:[%s284 + $0x60] sm:$0xff]
        %v344 = vld [vmem:[%s284 + $0x68] sm:$0xff]
        %v345 = vld [vmem:[%s284 + $0x70] sm:$0xff]
        %v346 = vld [vmem:[%s284 + $0x78] sm:$0xff]
        %v347 = vld [vmem:[%s284 + $0x80] sm:$0xff]
        %v348 = vld [vmem:[%s284 + $0x88] sm:$0xff]
        %v349 = vld [vmem:[%s284 + $0x90] sm:$0xff]
        %v350 = vld [vmem:[%s284 + $0x98] sm:$0xff]
        %v351 = vld [vmem:[%s284 + $0xa0] sm:$0xff]
        %v352 = vld [vmem:[%s284 + $0xa8] sm:$0xff]
        %v353 = vld [vmem:[%s284 + $0xb0] sm:$0xff]
        %v354 = vld [vmem:[%s284 + $0xb8] sm:$0xff]
        %v355 = vld [vmem:[%s284 + $0xc0] sm:$0xff]
        %v356 = vld [vmem:[%s284 + $0xc8] sm:$0xff]
        %v357 = vld [vmem:[%s284 + $0xd0] sm:$0xff]
        %v358 = vld [vmem:[%s284 + $0xd8] sm:$0xff]
        %v359 = vld [vmem:[%s284 + $0xe0] sm:$0xff]
        %v360 = vld [vmem:[%s284 + $0xe8] sm:$0xff]
        %v361 = vld [vmem:[%s284 + $0xf0] sm:$0xff]
        %v362 = vld [vmem:[%s284 + $0xf8] sm:$0xff]
        %v363 = vld [vmem:[#allocation5] sm:$0xff]
        %v364 = vld [vmem:[#allocation5 + $0x8] sm:$0xff]
        %v365 = vld [vmem:[#allocation5 + $0x10] sm:$0xff]
        %v366 = vld [vmem:[#allocation5 + $0x18] sm:$0xff]
        %v367 = vld [vmem:[#allocation5 + $0x20] sm:$0xff]
        %v368 = vld [vmem:[#allocation5 + $0x28] sm:$0xff]
        %v369 = vld [vmem:[#allocation5 + $0x30] sm:$0xff]
        %v370 = vld [vmem:[#allocation5 + $0x38] sm:$0xff]
        %v371 = vld [vmem:[#allocation5 + $0x40] sm:$0xff]
        %v372 = vld [vmem:[#allocation5 + $0x48] sm:$0xff]
        %v373 = vld [vmem:[#allocation5 + $0x50] sm:$0xff]
        %v374 = vld [vmem:[#allocation5 + $0x58] sm:$0xff]
        %v375 = vld [vmem:[#allocation5 + $0x60] sm:$0xff]
        %v376 = vld [vmem:[#allocation5 + $0x68] sm:$0xff]
        %v377 = vld [vmem:[#allocation5 + $0x70] sm:$0xff]
        %v378 = vld [vmem:[#allocation5 + $0x78] sm:$0xff]
        %v379 = vld [vmem:[#allocation5 + $0x80] sm:$0xff]
        %v380 = vld [vmem:[#allocation5 + $0x88] sm:$0xff]
        %v381 = vld [vmem:[#allocation5 + $0x90] sm:$0xff]
        %v382 = vld [vmem:[#allocation5 + $0x98] sm:$0xff]
        %v383 = vld [vmem:[#allocation5 + $0xa0] sm:$0xff]
        %v384 = vld [vmem:[#allocation5 + $0xa8] sm:$0xff]
        %v385 = vld [vmem:[#allocation5 + $0xb0] sm:$0xff]
        %v386 = vld [vmem:[#allocation5 + $0xb8] sm:$0xff]
        %v387 = vld [vmem:[#allocation5 + $0xc0] sm:$0xff]
        %v388 = vld [vmem:[#allocation5 + $0xc8] sm:$0xff]
        %v389 = vld [vmem:[#allocation5 + $0xd0] sm:$0xff]
        %v390 = vld [vmem:[#allocation5 + $0xd8] sm:$0xff]
        %v391 = vld [vmem:[#allocation5 + $0xe0] sm:$0xff]
        %v392 = vld [vmem:[#allocation5 + $0xe8] sm:$0xff]
        %v393 = vld [vmem:[#allocation5 + $0xf0] sm:$0xff]
        %v394 = vld [vmem:[#allocation5 + $0xf8] sm:$0xff]
        %v395 = vld [vmem:[%s5] sm:$0x1]
        %v396 = vlaneseq
        %v397 = vshrl.u32 %v396, 7
        %v398 = vsub.s32 0, %v397
        %v399 = vrot.slane %v395, %v398
        %400 = vmatprep.subr.mxu0 0.0
        %401 = vmatpush1.msra.mxu0 %v363
        %402 = vmatprep.subr.mxu0 0.0
        %403 = vmatpush1.msra.mxu0 %v364
        %404 = vmatprep.subr.mxu0 0.0
        %405 = vmatpush1.msra.mxu0 %v365
        %406 = vmatprep.subr.mxu0 0.0
        %407 = vmatpush1.msra.mxu0 %v366
        %408 = vmatprep.subr.mxu0 0.0
        %409 = vmatpush1.msra.mxu0 %v367
        %410 = vmatprep.subr.mxu0 0.0
        %411 = vmatpush1.msra.mxu0 %v368
        %412 = vmatprep.subr.mxu0 0.0
        %413 = vmatpush1.msra.mxu0 %v369
        %414 = vmatprep.subr.mxu0 0.0
        %415 = vmatpush1.msra.mxu0 %v370
        %416 = vmatprep.subr.mxu0 0.0
        %417 = vmatpush1.msra.mxu0 %v371
        %418 = vmatprep.subr.mxu0 0.0
        %419 = vmatpush1.msra.mxu0 %v372
        %420 = vmatprep.subr.mxu0 0.0
        %421 = vmatpush1.msra.mxu0 %v373
        %422 = vmatprep.subr.mxu0 0.0
        %423 = vmatpush1.msra.mxu0 %v374
        %424 = vmatprep.subr.mxu0 0.0
        %425 = vmatpush1.msra.mxu0 %v375
        %426 = vmatprep.subr.mxu0 0.0
        %427 = vmatpush1.msra.mxu0 %v376
        %428 = vmatprep.subr.mxu0 0.0
        %429 = vmatpush1.msra.mxu0 %v377
        %430 = vmatprep.subr.mxu0 0.0
        %431 = vmatpush1.msra.mxu0 %v378
        %432 = vmatprep.subr.mxu0 0.0
        %433 = vmatpush1.msra.mxu0 %v379
        %434 = vmatprep.subr.mxu0 0.0
        %435 = vmatpush1.msra.mxu0 %v380
        %436 = vmatprep.subr.mxu0 0.0
        %437 = vmatpush1.msra.mxu0 %v381
        %438 = vmatprep.subr.mxu0 0.0
        %439 = vmatpush1.msra.mxu0 %v382
        %440 = vmatprep.subr.mxu0 0.0
        %441 = vmatpush1.msra.mxu0 %v383
        %442 = vmatprep.subr.mxu0 0.0
        %443 = vmatpush1.msra.mxu0 %v384
        %444 = vmatprep.subr.mxu0 0.0
        %445 = vmatpush1.msra.mxu0 %v385
        %446 = vmatprep.subr.mxu0 0.0
        %447 = vmatpush1.msra.mxu0 %v386
        %448 = vmatprep.subr.mxu0 0.0
        %449 = vmatpush1.msra.mxu0 %v387
        %450 = vmatprep.subr.mxu0 0.0
        %451 = vmatpush1.msra.mxu0 %v388
        %452 = vmatprep.subr.mxu0 0.0
        %453 = vmatpush1.msra.mxu0 %v389
        %454 = vmatprep.subr.mxu0 0.0
        %455 = vmatpush1.msra.mxu0 %v390
        %456 = vmatprep.subr.mxu0 0.0
        %457 = vmatpush1.msra.mxu0 %v391
        %458 = vmatprep.subr.mxu0 0.0
        %459 = vmatpush1.msra.mxu0 %v392
        %460 = vmatprep.subr.mxu0 0.0
        %461 = vmatpush1.msra.mxu0 %v393
        %462 = vmatprep.subr.mxu0 0.0
        %463 = vmatpush1.msra.mxu0 %v394
        %464 = vmatprep.mubr.f32.mxu0 %v332
        %465 = vmatmul.mubr.f32.gmra.mrb[0].mxu0 %v331
        %v466 = vpop.f32.mrb[0].mxu0
        %v467 = vadd.f32 %v399, %v466
        %v468 = vpop.f32.mrb[0].mxu0
        %469 = vmatprep.mubr.f32.mxu0 %v334
        %470 = vmatmul.mubr.f32.gmra.mrb[0].mxu0 %v333
        %v471 = vpop.f32.mrb[0].mxu0
        %v472 = vadd.f32 %v399, %v471
        %v473 = vpop.f32.mrb[0].mxu0
        %474 = vmatprep.mubr.f32.mxu0 %v336
        %475 = vmatmul.mubr.f32.gmra.mrb[0].mxu0 %v335
        %v476 = vpop.f32.mrb[0].mxu0
        %v477 = vadd.f32 %v399, %v476
        %v478 = vpop.f32.mrb[0].mxu0
        %479 = vmatprep.mubr.f32.mxu0 %v338
        %480 = vmatmul.mubr.f32.gmra.mrb[0].mxu0 %v337
        %v481 = vpop.f32.mrb[0].mxu0
        %v482 = vadd.f32 %v399, %v481
        %v483 = vpop.f32.mrb[0].mxu0
        %484 = vmatprep.mubr.f32.mxu0 %v340
        %485 = vmatmul.mubr.f32.gmra.mrb[0].mxu0 %v339
        %v486 = vpop.f32.mrb[0].mxu0
        %v487 = vadd.f32 %v399, %v486
        %v488 = vpop.f32.mrb[0].mxu0
        %489 = vmatprep.mubr.f32.mxu0 %v342
        %490 = vmatmul.mubr.f32.gmra.mrb[0].mxu0 %v341
        %v491 = vpop.f32.mrb[0].mxu0
        %v492 = vadd.f32 %v399, %v491
        %v493 = vpop.f32.mrb[0].mxu0
        %494 = vmatprep.mubr.f32.mxu0 %v344
        %495 = vmatmul.mubr.f32.gmra.mrb[0].mxu0 %v343
        %v496 = vpop.f32.mrb[0].mxu0
        %v497 = vadd.f32 %v399, %v496
        %v498 = vpop.f32.mrb[0].mxu0
        %499 = vmatprep.mubr.f32.mxu0 %v346
        %500 = vmatmul.mubr.f32.gmra.mrb[0].mxu0 %v345
        %v501 = vpop.f32.mrb[0].mxu0
        %v502 = vadd.f32 %v399, %v501
        %v503 = vpop.f32.mrb[0].mxu0
        %504 = vmatprep.mubr.f32.mxu0 %v348
        %505 = vmatmul.mubr.f32.gmra.mrb[0].mxu0 %v347
        %v506 = vpop.f32.mrb[0].mxu0
        %v507 = vadd.f32 %v399, %v506
        %v508 = vpop.f32.mrb[0].mxu0
        %509 = vmatprep.mubr.f32.mxu0 %v350
        %510 = vmatmul.mubr.f32.gmra.mrb[0].mxu0 %v349
        %v511 = vpop.f32.mrb[0].mxu0
        %v512 = vadd.f32 %v399, %v511
        %v513 = vpop.f32.mrb[0].mxu0
        %514 = vmatprep.mubr.f32.mxu0 %v352
        %515 = vmatmul.mubr.f32.gmra.mrb[0].mxu0 %v351
        %v516 = vpop.f32.mrb[0].mxu0
        %v517 = vadd.f32 %v399, %v516
        %v518 = vpop.f32.mrb[0].mxu0
        %519 = vmatprep.mubr.f32.mxu0 %v354
        %520 = vmatmul.mubr.f32.gmra.mrb[0].mxu0 %v353
        %v521 = vpop.f32.mrb[0].mxu0
        %v522 = vadd.f32 %v399, %v521
        %v523 = vpop.f32.mrb[0].mxu0
        %524 = vmatprep.mubr.f32.mxu0 %v356
        %525 = vmatmul.mubr.f32.gmra.mrb[0].mxu0 %v355
        %v526 = vpop.f32.mrb[0].mxu0
        %v527 = vadd.f32 %v399, %v526
        %v528 = vpop.f32.mrb[0].mxu0
        %529 = vmatprep.mubr.f32.mxu0 %v358
        %530 = vmatmul.mubr.f32.gmra.mrb[0].mxu0 %v357
        %v531 = vpop.f32.mrb[0].mxu0
        %v532 = vadd.f32 %v399, %v531
        %v533 = vpop.f32.mrb[0].mxu0
        %534 = vmatprep.mubr.f32.mxu0 %v360
        %535 = vmatmul.mubr.f32.gmra.mrb[0].mxu0 %v359
        %v536 = vpop.f32.mrb[0].mxu0
        %v537 = vadd.f32 %v399, %v536
        %v538 = vpop.f32.mrb[0].mxu0
        %539 = vmatprep.mubr.f32.mxu0 %v362
        %540 = vmatmul.mubr.f32.gmra.mrb[0].mxu0 %v361
        %v541 = vpop.f32.mrb[0].mxu0
        %v542 = vadd.f32 %v399, %v541
        %v543 = vpop.f32.mrb[0].mxu0
        %544 = vdwg.mxu0
        %v545 = vmax.f32 %v467, 0.0
        %v546 = vmax.f32 %v472, 0.0
        %v547 = vmax.f32 %v477, 0.0
        %v548 = vmax.f32 %v482, 0.0
        %v549 = vmax.f32 %v487, 0.0
        %v550 = vmax.f32 %v492, 0.0
        %v551 = vmax.f32 %v497, 0.0
        %v552 = vmax.f32 %v502, 0.0
        %v553 = vmax.f32 %v507, 0.0
        %v554 = vmax.f32 %v512, 0.0
        %v555 = vmax.f32 %v517, 0.0
        %v556 = vmax.f32 %v522, 0.0
        %v557 = vmax.f32 %v527, 0.0
        %v558 = vmax.f32 %v532, 0.0
        %v559 = vmax.f32 %v537, 0.0
        %v560 = vmax.f32 %v542, 0.0
        %v561 = vld [vmem:[#allocation7] sm:$0xff]
        %v562 = vld [vmem:[#allocation7 + $0x8] sm:$0xff]
        %v563 = vld [vmem:[#allocation7 + $0x10] sm:$0xff]
        %v564 = vld [vmem:[#allocation7 + $0x18] sm:$0xff]
        %v565 = vld [vmem:[#allocation7 + $0x20] sm:$0xff]
        %v566 = vld [vmem:[#allocation7 + $0x28] sm:$0xff]
        %v567 = vld [vmem:[#allocation7 + $0x30] sm:$0xff]
        %v568 = vld [vmem:[#allocation7 + $0x38] sm:$0xff]
        %v569 = vld [vmem:[#allocation7 + $0x40] sm:$0xff]
        %v570 = vld [vmem:[#allocation7 + $0x48] sm:$0xff]
        %v571 = vld [vmem:[#allocation7 + $0x50] sm:$0xff]
        %v572 = vld [vmem:[#allocation7 + $0x58] sm:$0xff]
        %v573 = vld [vmem:[#allocation7 + $0x60] sm:$0xff]
        %v574 = vld [vmem:[#allocation7 + $0x68] sm:$0xff]
        %v575 = vld [vmem:[#allocation7 + $0x70] sm:$0xff]
        %v576 = vld [vmem:[#allocation7 + $0x78] sm:$0xff]
        %v577 = vld [vmem:[%s5 + $0x1] sm:$0x1]
        %v578 = vlaneseq
        %v579 = vshrl.u32 %v578, 7
        %v580 = vsub.s32 0, %v579
        %v581 = vrot.slane %v577, %v580
        %582 = vmatprep.subr.mxu0 0.0
        %583 = vmatpush1.msra.mxu0 %v561
        %584 = vmatprep.subr.mxu0 0.0
        %585 = vmatpush1.msra.mxu0 %v562
        %586 = vmatprep.subr.mxu0 0.0
        %587 = vmatpush1.msra.mxu0 %v563
        %588 = vmatprep.subr.mxu0 0.0
        %589 = vmatpush1.msra.mxu0 %v564
        %590 = vmatprep.subr.mxu0 0.0
        %591 = vmatpush1.msra.mxu0 %v565
        %592 = vmatprep.subr.mxu0 0.0
        %593 = vmatpush1.msra.mxu0 %v566
        %594 = vmatprep.subr.mxu0 0.0
        %595 = vmatpush1.msra.mxu0 %v567
        %596 = vmatprep.subr.mxu0 0.0
        %597 = vmatpush1.msra.mxu0 %v568
        %598 = vmatprep.subr.mxu0 0.0
        %599 = vmatpush1.msra.mxu0 %v569
        %600 = vmatprep.subr.mxu0 0.0
        %601 = vmatpush1.msra.mxu0 %v570
        %602 = vmatprep.subr.mxu0 0.0
        %603 = vmatpush1.msra.mxu0 %v571
        %604 = vmatprep.subr.mxu0 0.0
        %605 = vmatpush1.msra.mxu0 %v572
        %606 = vmatprep.subr.mxu0 0.0
        %607 = vmatpush1.msra.mxu0 %v573
        %608 = vmatprep.subr.mxu0 0.0
        %609 = vmatpush1.msra.mxu0 %v574
        %610 = vmatprep.subr.mxu0 0.0
        %611 = vmatpush1.msra.mxu0 %v575
        %612 = vmatprep.subr.mxu0 0.0
        %613 = vmatpush1.msra.mxu0 %v576
        %614 = vmatprep.subr.mxu0 0.0
        %615 = vmatpush1.msra.mxu0 0.0
        %616 = vmatprep.subr.mxu0 0.0
        %617 = vmatpush1.msra.mxu0 0.0
        %618 = vmatprep.subr.mxu0 0.0
        %619 = vmatpush1.msra.mxu0 0.0
        %620 = vmatprep.subr.mxu0 0.0
        %621 = vmatpush1.msra.mxu0 0.0
        %622 = vmatprep.subr.mxu0 0.0
        %623 = vmatpush1.msra.mxu0 0.0
        %624 = vmatprep.subr.mxu0 0.0
        %625 = vmatpush1.msra.mxu0 0.0
        %626 = vmatprep.subr.mxu0 0.0
        %627 = vmatpush1.msra.mxu0 0.0
        %628 = vmatprep.subr.mxu0 0.0
        %629 = vmatpush1.msra.mxu0 0.0
        %630 = vmatprep.subr.mxu0 0.0
        %631 = vmatpush1.msra.mxu0 0.0
        %632 = vmatprep.subr.mxu0 0.0
        %633 = vmatpush1.msra.mxu0 0.0
        %634 = vmatprep.subr.mxu0 0.0
        %635 = vmatpush1.msra.mxu0 0.0
        %636 = vmatprep.subr.mxu0 0.0
        %637 = vmatpush1.msra.mxu0 0.0
        %638 = vmatprep.subr.mxu0 0.0
        %639 = vmatpush1.msra.mxu0 0.0
        %640 = vmatprep.subr.mxu0 0.0
        %641 = vmatpush1.msra.mxu0 0.0
        %642 = vmatprep.subr.mxu0 0.0
        %643 = vmatpush1.msra.mxu0 0.0
        %644 = vmatprep.subr.mxu0 0.0
        %645 = vmatpush1.msra.mxu0 0.0
        %646 = vmatprep.mubr.f32.mxu0 0.0
        %647 = vmatmul.mubr.f32.gmra.mrb[0].mxu0 %v545
        %v648 = vpop.f32.mrb[0].mxu0
        %v649 = vadd.f32 %v581, %v648
        %v650 = vpop.f32.mrb[0].mxu0
        %651 = vmatprep.mubr.f32.mxu0 0.0
        %652 = vmatmul.mubr.f32.gmra.mrb[0].mxu0 %v546
        %v653 = vpop.f32.mrb[0].mxu0
        %v654 = vadd.f32 %v581, %v653
        %v655 = vpop.f32.mrb[0].mxu0
        %656 = vmatprep.mubr.f32.mxu0 0.0
        %657 = vmatmul.mubr.f32.gmra.mrb[0].mxu0 %v547
        %v658 = vpop.f32.mrb[0].mxu0
        %v659 = vadd.f32 %v581, %v658
        %v660 = vpop.f32.mrb[0].mxu0
        %661 = vmatprep.mubr.f32.mxu0 0.0
        %662 = vmatmul.mubr.f32.gmra.mrb[0].mxu0 %v548
        %v663 = vpop.f32.mrb[0].mxu0
        %v664 = vadd.f32 %v581, %v663
        %v665 = vpop.f32.mrb[0].mxu0
        %666 = vmatprep.mubr.f32.mxu0 0.0
        %667 = vmatmul.mubr.f32.gmra.mrb[0].mxu0 %v549
        %v668 = vpop.f32.mrb[0].mxu0
        %v669 = vadd.f32 %v581, %v668
        %v670 = vpop.f32.mrb[0].mxu0
        %671 = vmatprep.mubr.f32.mxu0 0.0
        %672 = vmatmul.mubr.f32.gmra.mrb[0].mxu0 %v550
        %v673 = vpop.f32.mrb[0].mxu0
        %v674 = vadd.f32 %v581, %v673
        %v675 = vpop.f32.mrb[0].mxu0
        %676 = vmatprep.mubr.f32.mxu0 0.0
        %677 = vmatmul.mubr.f32.gmra.mrb[0].mxu0 %v551
        %v678 = vpop.f32.mrb[0].mxu0
        %v679 = vadd.f32 %v581, %v678
        %v680 = vpop.f32.mrb[0].mxu0
        %681 = vmatprep.mubr.f32.mxu0 0.0
        %682 = vmatmul.mubr.f32.gmra.mrb[0].mxu0 %v552
        %v683 = vpop.f32.mrb[0].mxu0
        %v684 = vadd.f32 %v581, %v683
        %v685 = vpop.f32.mrb[0].mxu0
        %686 = vmatprep.mubr.f32.mxu0 0.0
        %687 = vmatmul.mubr.f32.gmra.mrb[0].mxu0 %v553
        %v688 = vpop.f32.mrb[0].mxu0
        %v689 = vadd.f32 %v581, %v688
        %v690 = vpop.f32.mrb[0].mxu0
        %691 = vmatprep.mubr.f32.mxu0 0.0
        %692 = vmatmul.mubr.f32.gmra.mrb[0].mxu0 %v554
        %v693 = vpop.f32.mrb[0].mxu0
        %v694 = vadd.f32 %v581, %v693
        %v695 = vpop.f32.mrb[0].mxu0
        %696 = vmatprep.mubr.f32.mxu0 0.0
        %697 = vmatmul.mubr.f32.gmra.mrb[0].mxu0 %v555
        %v698 = vpop.f32.mrb[0].mxu0
        %v699 = vadd.f32 %v581, %v698
        %v700 = vpop.f32.mrb[0].mxu0
        %701 = vmatprep.mubr.f32.mxu0 0.0
        %702 = vmatmul.mubr.f32.gmra.mrb[0].mxu0 %v556
        %v703 = vpop.f32.mrb[0].mxu0
        %v704 = vadd.f32 %v581, %v703
        %v705 = vpop.f32.mrb[0].mxu0
        %706 = vmatprep.mubr.f32.mxu0 0.0
        %707 = vmatmul.mubr.f32.gmra.mrb[0].mxu0 %v557
        %v708 = vpop.f32.mrb[0].mxu0
        %v709 = vadd.f32 %v581, %v708
        %v710 = vpop.f32.mrb[0].mxu0
        %711 = vmatprep.mubr.f32.mxu0 0.0
        %712 = vmatmul.mubr.f32.gmra.mrb[0].mxu0 %v558
        %v713 = vpop.f32.mrb[0].mxu0
        %v714 = vadd.f32 %v581, %v713
        %v715 = vpop.f32.mrb[0].mxu0
        %716 = vmatprep.mubr.f32.mxu0 0.0
        %717 = vmatmul.mubr.f32.gmra.mrb[0].mxu0 %v559
        %v718 = vpop.f32.mrb[0].mxu0
        %v719 = vadd.f32 %v581, %v718
        %v720 = vpop.f32.mrb[0].mxu0
        %721 = vmatprep.mubr.f32.mxu0 0.0
        %722 = vmatmul.mubr.f32.gmra.mrb[0].mxu0 %v560
        %v723 = vpop.f32.mrb[0].mxu0
        %v724 = vadd.f32 %v581, %v723
        %v725 = vpop.f32.mrb[0].mxu0
        %726 = vdwg.mxu0
        %v727 = vld [vmem:[#allocation8] sm:$0xff]
        %v728 = vld [vmem:[#allocation8 + $0x8] sm:$0xff]
        %v729 = vld [vmem:[#allocation8 + $0x10] sm:$0xff]
        %v730 = vld [vmem:[#allocation8 + $0x18] sm:$0xff]
        %v731 = vld [vmem:[#allocation8 + $0x20] sm:$0xff]
        %v732 = vld [vmem:[#allocation8 + $0x28] sm:$0xff]
        %v733 = vld [vmem:[#allocation8 + $0x30] sm:$0xff]
        %v734 = vld [vmem:[#allocation8 + $0x38] sm:$0xff]
        %v735 = vld [vmem:[#allocation8 + $0x40] sm:$0xff]
        %v736 = vld [vmem:[#allocation8 + $0x48] sm:$0xff]
        %v737 = vld [vmem:[#allocation8 + $0x50] sm:$0xff]
        %v738 = vld [vmem:[#allocation8 + $0x58] sm:$0xff]
        %v739 = vld [vmem:[#allocation8 + $0x60] sm:$0xff]
        %v740 = vld [vmem:[#allocation8 + $0x68] sm:$0xff]
        %v741 = vld [vmem:[#allocation8 + $0x70] sm:$0xff]
        %v742 = vld [vmem:[#allocation8 + $0x78] sm:$0xff]
        %v743 = vld [vmem:[%s5 + $0x2] sm:$0x1]
        %v744 = vlaneseq
        %v745 = vshrl.u32 %v744, 7
        %v746 = vsub.s32 0, %v745
        %v747 = vrot.slane %v743, %v746
        %748 = vmatprep.subr.mxu0 0.0
        %749 = vmatpush1.msra.mxu0 %v727
        %750 = vmatprep.subr.mxu0 0.0
        %751 = vmatpush1.msra.mxu0 %v728
        %752 = vmatprep.subr.mxu0 0.0
        %753 = vmatpush1.msra.mxu0 %v729
        %754 = vmatprep.subr.mxu0 0.0
        %755 = vmatpush1.msra.mxu0 %v730
        %756 = vmatprep.subr.mxu0 0.0
        %757 = vmatpush1.msra.mxu0 %v731
        %758 = vmatprep.subr.mxu0 0.0
        %759 = vmatpush1.msra.mxu0 %v732
        %760 = vmatprep.subr.mxu0 0.0
        %761 = vmatpush1.msra.mxu0 %v733
        %762 = vmatprep.subr.mxu0 0.0
        %763 = vmatpush1.msra.mxu0 %v734
        %764 = vmatprep.subr.mxu0 0.0
        %765 = vmatpush1.msra.mxu0 %v735
        %766 = vmatprep.subr.mxu0 0.0
        %767 = vmatpush1.msra.mxu0 %v736
        %768 = vmatprep.subr.mxu0 0.0
        %769 = vmatpush1.msra.mxu0 %v737
        %770 = vmatprep.subr.mxu0 0.0
        %771 = vmatpush1.msra.mxu0 %v738
        %772 = vmatprep.subr.mxu0 0.0
        %773 = vmatpush1.msra.mxu0 %v739
        %774 = vmatprep.subr.mxu0 0.0
        %775 = vmatpush1.msra.mxu0 %v740
        %776 = vmatprep.subr.mxu0 0.0
        %777 = vmatpush1.msra.mxu0 %v741
        %778 = vmatprep.subr.mxu0 0.0
        %779 = vmatpush1.msra.mxu0 %v742
        %780 = vmatprep.subr.mxu0 0.0
        %781 = vmatpush1.msra.mxu0 0.0
        %782 = vmatprep.subr.mxu0 0.0
        %783 = vmatpush1.msra.mxu0 0.0
        %784 = vmatprep.subr.mxu0 0.0
        %785 = vmatpush1.msra.mxu0 0.0
        %786 = vmatprep.subr.mxu0 0.0
        %787 = vmatpush1.msra.mxu0 0.0
        %788 = vmatprep.subr.mxu0 0.0
        %789 = vmatpush1.msra.mxu0 0.0
        %790 = vmatprep.subr.mxu0 0.0
        %791 = vmatpush1.msra.mxu0 0.0
        %792 = vmatprep.subr.mxu0 0.0
        %793 = vmatpush1.msra.mxu0 0.0
        %794 = vmatprep.subr.mxu0 0.0
        %795 = vmatpush1.msra.mxu0 0.0
        %796 = vmatprep.subr.mxu0 0.0
        %797 = vmatpush1.msra.mxu0 0.0
        %798 = vmatprep.subr.mxu0 0.0
        %799 = vmatpush1.msra.mxu0 0.0
        %800 = vmatprep.subr.mxu0 0.0
        %801 = vmatpush1.msra.mxu0 0.0
        %802 = vmatprep.subr.mxu0 0.0
        %803 = vmatpush1.msra.mxu0 0.0
        %804 = vmatprep.subr.mxu0 0.0
        %805 = vmatpush1.msra.mxu0 0.0
        %806 = vmatprep.subr.mxu0 0.0
        %807 = vmatpush1.msra.mxu0 0.0
        %808 = vmatprep.subr.mxu0 0.0
        %809 = vmatpush1.msra.mxu0 0.0
        %810 = vmatprep.subr.mxu0 0.0
        %811 = vmatpush1.msra.mxu0 0.0
        %812 = vmatprep.mubr.f32.mxu0 0.0
        %813 = vmatmul.mubr.f32.gmra.mrb[0].mxu0 %v649
        %v814 = vpop.f32.mrb[0].mxu0
        %v815 = vadd.f32 %v747, %v814
        %v816 = vpop.f32.mrb[0].mxu0
        %817 = vmatprep.mubr.f32.mxu0 0.0
        %818 = vmatmul.mubr.f32.gmra.mrb[0].mxu0 %v654
        %v819 = vpop.f32.mrb[0].mxu0
        %v820 = vadd.f32 %v747, %v819
        %v821 = vpop.f32.mrb[0].mxu0
        %822 = vmatprep.mubr.f32.mxu0 0.0
        %823 = vmatmul.mubr.f32.gmra.mrb[0].mxu0 %v659
        %v824 = vpop.f32.mrb[0].mxu0
        %v825 = vadd.f32 %v747, %v824
        %v826 = vpop.f32.mrb[0].mxu0
        %827 = vmatprep.mubr.f32.mxu0 0.0
        %828 = vmatmul.mubr.f32.gmra.mrb[0].mxu0 %v664
        %v829 = vpop.f32.mrb[0].mxu0
        %v830 = vadd.f32 %v747, %v829
        %v831 = vpop.f32.mrb[0].mxu0
        %832 = vmatprep.mubr.f32.mxu0 0.0
        %833 = vmatmul.mubr.f32.gmra.mrb[0].mxu0 %v669
        %v834 = vpop.f32.mrb[0].mxu0
        %v835 = vadd.f32 %v747, %v834
        %v836 = vpop.f32.mrb[0].mxu0
        %837 = vmatprep.mubr.f32.mxu0 0.0
        %838 = vmatmul.mubr.f32.gmra.mrb[0].mxu0 %v674
        %v839 = vpop.f32.mrb[0].mxu0
        %v840 = vadd.f32 %v747, %v839
        %v841 = vpop.f32.mrb[0].mxu0
        %842 = vmatprep.mubr.f32.mxu0 0.0
        %843 = vmatmul.mubr.f32.gmra.mrb[0].mxu0 %v679
        %v844 = vpop.f32.mrb[0].mxu0
        %v845 = vadd.f32 %v747, %v844
        %v846 = vpop.f32.mrb[0].mxu0
        %847 = vmatprep.mubr.f32.mxu0 0.0
        %848 = vmatmul.mubr.f32.gmra.mrb[0].mxu0 %v684
        %v849 = vpop.f32.mrb[0].mxu0
        %v850 = vadd.f32 %v747, %v849
        %v851 = vpop.f32.mrb[0].mxu0
        %852 = vmatprep.mubr.f32.mxu0 0.0
        %853 = vmatmul.mubr.f32.gmra.mrb[0].mxu0 %v689
        %v854 = vpop.f32.mrb[0].mxu0
        %v855 = vadd.f32 %v747, %v854
        %v856 = vpop.f32.mrb[0].mxu0
        %857 = vmatprep.mubr.f32.mxu0 0.0
        %858 = vmatmul.mubr.f32.gmra.mrb[0].mxu0 %v694
        %v859 = vpop.f32.mrb[0].mxu0
        %v860 = vadd.f32 %v747, %v859
        %v861 = vpop.f32.mrb[0].mxu0
        %862 = vmatprep.mubr.f32.mxu0 0.0
        %863 = vmatmul.mubr.f32.gmra.mrb[0].mxu0 %v699
        %v864 = vpop.f32.mrb[0].mxu0
        %v865 = vadd.f32 %v747, %v864
        %v866 = vpop.f32.mrb[0].mxu0
        %867 = vmatprep.mubr.f32.mxu0 0.0
        %868 = vmatmul.mubr.f32.gmra.mrb[0].mxu0 %v704
        %v869 = vpop.f32.mrb[0].mxu0
        %v870 = vadd.f32 %v747, %v869
        %v871 = vpop.f32.mrb[0].mxu0
        %872 = vmatprep.mubr.f32.mxu0 0.0
        %873 = vmatmul.mubr.f32.gmra.mrb[0].mxu0 %v709
        %v874 = vpop.f32.mrb[0].mxu0
        %v875 = vadd.f32 %v747, %v874
        %v876 = vpop.f32.mrb[0].mxu0
        %877 = vmatprep.mubr.f32.mxu0 0.0
        %878 = vmatmul.mubr.f32.gmra.mrb[0].mxu0 %v714
        %v879 = vpop.f32.mrb[0].mxu0
        %v880 = vadd.f32 %v747, %v879
        %v881 = vpop.f32.mrb[0].mxu0
        %882 = vmatprep.mubr.f32.mxu0 0.0
        %883 = vmatmul.mubr.f32.gmra.mrb[0].mxu0 %v719
        %v884 = vpop.f32.mrb[0].mxu0
        %v885 = vadd.f32 %v747, %v884
        %v886 = vpop.f32.mrb[0].mxu0
        %887 = vmatprep.mubr.f32.mxu0 0.0
        %888 = vmatmul.mubr.f32.gmra.mrb[0].mxu0 %v724
        %v889 = vpop.f32.mrb[0].mxu0
        %v890 = vadd.f32 %v747, %v889
        %v891 = vpop.f32.mrb[0].mxu0
        %892 = vdwg.mxu0
        %v893 = vmax.f32 %v815, 0.0
        %v894 = vmax.f32 %v820, 0.0
        %v895 = vmax.f32 %v825, 0.0
        %v896 = vmax.f32 %v830, 0.0
        %v897 = vmax.f32 %v835, 0.0
        %v898 = vmax.f32 %v840, 0.0
        %v899 = vmax.f32 %v845, 0.0
        %v900 = vmax.f32 %v850, 0.0
        %v901 = vmax.f32 %v855, 0.0
        %v902 = vmax.f32 %v860, 0.0
        %v903 = vmax.f32 %v865, 0.0
        %v904 = vmax.f32 %v870, 0.0
        %v905 = vmax.f32 %v875, 0.0
        %v906 = vmax.f32 %v880, 0.0
        %v907 = vmax.f32 %v885, 0.0
        %v908 = vmax.f32 %v890, 0.0
        %v909 = vld [vmem:[#allocation10] sm:$0xff]
        %v910 = vld [vmem:[#allocation10 + $0x8] sm:$0xff]
        %v911 = vld [vmem:[#allocation10 + $0x10] sm:$0xff]
        %v912 = vld [vmem:[#allocation10 + $0x18] sm:$0xff]
        %v913 = vld [vmem:[#allocation10 + $0x20] sm:$0xff]
        %v914 = vld [vmem:[#allocation10 + $0x28] sm:$0xff]
        %v915 = vld [vmem:[#allocation10 + $0x30] sm:$0xff]
        %v916 = vld [vmem:[#allocation10 + $0x38] sm:$0xff]
        %v917 = vld [vmem:[#allocation10 + $0x40] sm:$0xff]
        %v918 = vld [vmem:[#allocation10 + $0x48] sm:$0xff]
        %v919 = vld [vmem:[#allocation10 + $0x50] sm:$0xff]
        %v920 = vld [vmem:[#allocation10 + $0x58] sm:$0xff]
        %v921 = vld [vmem:[#allocation10 + $0x60] sm:$0xff]
        %v922 = vld [vmem:[#allocation10 + $0x68] sm:$0xff]
        %v923 = vld [vmem:[#allocation10 + $0x70] sm:$0xff]
        %v924 = vld [vmem:[#allocation10 + $0x78] sm:$0xff]
        %v925 = vld [vmem:[#allocation10 + $0x80] sm:$0xff]
        %v926 = vld [vmem:[#allocation10 + $0x88] sm:$0xff]
        %v927 = vld [vmem:[#allocation10 + $0x90] sm:$0xff]
        %v928 = vld [vmem:[#allocation10 + $0x98] sm:$0xff]
        %v929 = vld [vmem:[#allocation10 + $0xa0] sm:$0xff]
        %v930 = vld [vmem:[#allocation10 + $0xa8] sm:$0xff]
        %v931 = vld [vmem:[#allocation10 + $0xb0] sm:$0xff]
        %v932 = vld [vmem:[#allocation10 + $0xb8] sm:$0xff]
        %v933 = vld [vmem:[#allocation10 + $0xc0] sm:$0xff]
        %v934 = vld [vmem:[#allocation10 + $0xc8] sm:$0xff]
        %v935 = vld [vmem:[#allocation10 + $0xd0] sm:$0xff]
        %v936 = vld [vmem:[#allocation10 + $0xd8] sm:$0xff]
        %v937 = vld [vmem:[#allocation10 + $0xe0] sm:$0xff]
        %v938 = vld [vmem:[#allocation10 + $0xe8] sm:$0xff]
        %v939 = vld [vmem:[#allocation10 + $0xf0] sm:$0xff]
        %v940 = vld [vmem:[#allocation10 + $0xf8] sm:$0xff]
        %s941 = scalar_lea.vmem %s5, 3
        %v942 = vld [vmem:[%s941] ss:$4 sm:$0x3]
        %v944 = vlaneseq
        %v945 = vshrl.u32 %v944, 7
        %v946 = vsub.s32 0, %v945
        %v947 = vrot.slane %v942, %v946
        %v948 = vlaneseq
        %v949 = vshrl.u32 %v948, 7
        %v950 = vsub.s32 1, %v949
        %v951 = vrot.slane %v942, %v950
        %954 = vmatprep.subr.mxu0 %v910
        %955 = vmatpush1.msra.mxu0 %v909
        %956 = vmatprep.subr.mxu0 %v912
        %957 = vmatpush1.msra.mxu0 %v911
        %958 = vmatprep.subr.mxu0 %v914
        %959 = vmatpush1.msra.mxu0 %v913
        %960 = vmatprep.subr.mxu0 %v916
        %961 = vmatpush1.msra.mxu0 %v915
        %962 = vmatprep.subr.mxu0 %v918
        %963 = vmatpush1.msra.mxu0 %v917
        %964 = vmatprep.subr.mxu0 %v920
        %965 = vmatpush1.msra.mxu0 %v919
        %966 = vmatprep.subr.mxu0 %v922
        %967 = vmatpush1.msra.mxu0 %v921
        %968 = vmatprep.subr.mxu0 %v924
        %969 = vmatpush1.msra.mxu0 %v923
        %970 = vmatprep.subr.mxu0 %v926
        %971 = vmatpush1.msra.mxu0 %v925
        %972 = vmatprep.subr.mxu0 %v928
        %973 = vmatpush1.msra.mxu0 %v927
        %974 = vmatprep.subr.mxu0 %v930
        %975 = vmatpush1.msra.mxu0 %v929
        %976 = vmatprep.subr.mxu0 %v932
        %977 = vmatpush1.msra.mxu0 %v931
        %978 = vmatprep.subr.mxu0 %v934
        %979 = vmatpush1.msra.mxu0 %v933
        %980 = vmatprep.subr.mxu0 %v936
        %981 = vmatpush1.msra.mxu0 %v935
        %982 = vmatprep.subr.mxu0 %v938
        %983 = vmatpush1.msra.mxu0 %v937
        %984 = vmatprep.subr.mxu0 %v940
        %985 = vmatpush1.msra.mxu0 %v939
        %986 = vmatprep.subr.mxu0 0.0
        %987 = vmatpush1.msra.mxu0 0.0
        %988 = vmatprep.subr.mxu0 0.0
        %989 = vmatpush1.msra.mxu0 0.0
        %990 = vmatprep.subr.mxu0 0.0
        %991 = vmatpush1.msra.mxu0 0.0
        %992 = vmatprep.subr.mxu0 0.0
        %993 = vmatpush1.msra.mxu0 0.0
        %994 = vmatprep.subr.mxu0 0.0
        %995 = vmatpush1.msra.mxu0 0.0
        %996 = vmatprep.subr.mxu0 0.0
        %997 = vmatpush1.msra.mxu0 0.0
        %998 = vmatprep.subr.mxu0 0.0
        %999 = vmatpush1.msra.mxu0 0.0
        %1000 = vmatprep.subr.mxu0 0.0
        %1001 = vmatpush1.msra.mxu0 0.0
        %1002 = vmatprep.subr.mxu0 0.0
        %1003 = vmatpush1.msra.mxu0 0.0
        %1004 = vmatprep.subr.mxu0 0.0
        %1005 = vmatpush1.msra.mxu0 0.0
        %1006 = vmatprep.subr.mxu0 0.0
        %1007 = vmatpush1.msra.mxu0 0.0
        %1008 = vmatprep.subr.mxu0 0.0
        %1009 = vmatpush1.msra.mxu0 0.0
        %1010 = vmatprep.subr.mxu0 0.0
        %1011 = vmatpush1.msra.mxu0 0.0
        %1012 = vmatprep.subr.mxu0 0.0
        %1013 = vmatpush1.msra.mxu0 0.0
        %1014 = vmatprep.subr.mxu0 0.0
        %1015 = vmatpush1.msra.mxu0 0.0
        %1016 = vmatprep.subr.mxu0 0.0
        %1017 = vmatpush1.msra.mxu0 0.0
        %1018 = vmatprep.mubr.f32.mxu0 0.0
        %1019 = vmatmul.mubr.f32.gmra.mrb[0].mxu0 %v893
        %v1020 = vpop.f32.mrb[0].mxu0
        %v1021 = vadd.f32 %v947, %v1020
        %v1022 = vpop.f32.mrb[0].mxu0
        %v1023 = vadd.f32 %v951, %v1022
        %1024 = vmatprep.mubr.f32.mxu0 0.0
        %1025 = vmatmul.mubr.f32.gmra.mrb[0].mxu0 %v894
        %v1026 = vpop.f32.mrb[0].mxu0
        %v1027 = vadd.f32 %v947, %v1026
        %v1028 = vpop.f32.mrb[0].mxu0
        %v1029 = vadd.f32 %v951, %v1028
        %1030 = vmatprep.mubr.f32.mxu0 0.0
        %1031 = vmatmul.mubr.f32.gmra.mrb[0].mxu0 %v895
        %v1032 = vpop.f32.mrb[0].mxu0
        %v1033 = vadd.f32 %v947, %v1032
        %v1034 = vpop.f32.mrb[0].mxu0
        %v1035 = vadd.f32 %v951, %v1034
        %1036 = vmatprep.mubr.f32.mxu0 0.0
        %1037 = vmatmul.mubr.f32.gmra.mrb[0].mxu0 %v896
        %v1038 = vpop.f32.mrb[0].mxu0
        %v1039 = vadd.f32 %v947, %v1038
        %v1040 = vpop.f32.mrb[0].mxu0
        %v1041 = vadd.f32 %v951, %v1040
        %1042 = vmatprep.mubr.f32.mxu0 0.0
        %1043 = vmatmul.mubr.f32.gmra.mrb[0].mxu0 %v897
        %v1044 = vpop.f32.mrb[0].mxu0
        %v1045 = vadd.f32 %v947, %v1044
        %v1046 = vpop.f32.mrb[0].mxu0
        %v1047 = vadd.f32 %v951, %v1046
        %1048 = vmatprep.mubr.f32.mxu0 0.0
        %1049 = vmatmul.mubr.f32.gmra.mrb[0].mxu0 %v898
        %v1050 = vpop.f32.mrb[0].mxu0
        %v1051 = vadd.f32 %v947, %v1050
        %v1052 = vpop.f32.mrb[0].mxu0
        %v1053 = vadd.f32 %v951, %v1052
        %1054 = vmatprep.mubr.f32.mxu0 0.0
        %1055 = vmatmul.mubr.f32.gmra.mrb[0].mxu0 %v899
        %v1056 = vpop.f32.mrb[0].mxu0
        %v1057 = vadd.f32 %v947, %v1056
        %v1058 = vpop.f32.mrb[0].mxu0
        %v1059 = vadd.f32 %v951, %v1058
        %1060 = vmatprep.mubr.f32.mxu0 0.0
        %1061 = vmatmul.mubr.f32.gmra.mrb[0].mxu0 %v900
        %v1062 = vpop.f32.mrb[0].mxu0
        %v1063 = vadd.f32 %v947, %v1062
        %v1064 = vpop.f32.mrb[0].mxu0
        %v1065 = vadd.f32 %v951, %v1064
        %1066 = vmatprep.mubr.f32.mxu0 0.0
        %1067 = vmatmul.mubr.f32.gmra.mrb[0].mxu0 %v901
        %v1068 = vpop.f32.mrb[0].mxu0
        %v1069 = vadd.f32 %v947, %v1068
        %v1070 = vpop.f32.mrb[0].mxu0
        %v1071 = vadd.f32 %v951, %v1070
        %1072 = vmatprep.mubr.f32.mxu0 0.0
        %1073 = vmatmul.mubr.f32.gmra.mrb[0].mxu0 %v902
        %v1074 = vpop.f32.mrb[0].mxu0
        %v1075 = vadd.f32 %v947, %v1074
        %v1076 = vpop.f32.mrb[0].mxu0
        %v1077 = vadd.f32 %v951, %v1076
        %1078 = vmatprep.mubr.f32.mxu0 0.0
        %1079 = vmatmul.mubr.f32.gmra.mrb[0].mxu0 %v903
        %v1080 = vpop.f32.mrb[0].mxu0
        %v1081 = vadd.f32 %v947, %v1080
        %v1082 = vpop.f32.mrb[0].mxu0
        %v1083 = vadd.f32 %v951, %v1082
        %1084 = vmatprep.mubr.f32.mxu0 0.0
        %1085 = vmatmul.mubr.f32.gmra.mrb[0].mxu0 %v904
        %v1086 = vpop.f32.mrb[0].mxu0
        %v1087 = vadd.f32 %v947, %v1086
        %v1088 = vpop.f32.mrb[0].mxu0
        %v1089 = vadd.f32 %v951, %v1088
        %1090 = vmatprep.mubr.f32.mxu0 0.0
        %1091 = vmatmul.mubr.f32.gmra.mrb[0].mxu0 %v905
        %v1092 = vpop.f32.mrb[0].mxu0
        %v1093 = vadd.f32 %v947, %v1092
        %v1094 = vpop.f32.mrb[0].mxu0
        %v1095 = vadd.f32 %v951, %v1094
        %1096 = vmatprep.mubr.f32.mxu0 0.0
        %1097 = vmatmul.mubr.f32.gmra.mrb[0].mxu0 %v906
        %v1098 = vpop.f32.mrb[0].mxu0
        %v1099 = vadd.f32 %v947, %v1098
        %v1100 = vpop.f32.mrb[0].mxu0
        %v1101 = vadd.f32 %v951, %v1100
        %1102 = vmatprep.mubr.f32.mxu0 0.0
        %1103 = vmatmul.mubr.f32.gmra.mrb[0].mxu0 %v907
        %v1104 = vpop.f32.mrb[0].mxu0
        %v1105 = vadd.f32 %v947, %v1104
        %v1106 = vpop.f32.mrb[0].mxu0
        %v1107 = vadd.f32 %v951, %v1106
        %1108 = vmatprep.mubr.f32.mxu0 0.0
        %1109 = vmatmul.mubr.f32.gmra.mrb[0].mxu0 %v908
        %v1110 = vpop.f32.mrb[0].mxu0
        %v1111 = vadd.f32 %v947, %v1110
        %v1112 = vpop.f32.mrb[0].mxu0
        %v1113 = vadd.f32 %v951, %v1112
        %1114 = vdwg.mxu0
        %1115 = vst [vmem:[%s328] sm:$0xff] %v1021
        %1116 = vst [vmem:[%s328 + $0x8] sm:$0xff] %v1023
        %1117 = vst [vmem:[%s328 + $0x10] sm:$0xff] %v1027
        %1118 = vst [vmem:[%s328 + $0x18] sm:$0xff] %v1029
        %1119 = vst [vmem:[%s328 + $0x20] sm:$0xff] %v1033
        %1120 = vst [vmem:[%s328 + $0x28] sm:$0xff] %v1035
        %1121 = vst [vmem:[%s328 + $0x30] sm:$0xff] %v1039
        %1122 = vst [vmem:[%s328 + $0x38] sm:$0xff] %v1041
        %1123 = vst [vmem:[%s328 + $0x40] sm:$0xff] %v1045
        %1124 = vst [vmem:[%s328 + $0x48] sm:$0xff] %v1047
        %1125 = vst [vmem:[%s328 + $0x50] sm:$0xff] %v1051
        %1126 = vst [vmem:[%s328 + $0x58] sm:$0xff] %v1053
        %1127 = vst [vmem:[%s328 + $0x60] sm:$0xff] %v1057
        %1128 = vst [vmem:[%s328 + $0x68] sm:$0xff] %v1059
        %1129 = vst [vmem:[%s328 + $0x70] sm:$0xff] %v1063
        %1130 = vst [vmem:[%s328 + $0x78] sm:$0xff] %v1065
        %1131 = vst [vmem:[%s328 + $0x80] sm:$0xff] %v1069
        %1132 = vst [vmem:[%s328 + $0x88] sm:$0xff] %v1071
        %1133 = vst [vmem:[%s328 + $0x90] sm:$0xff] %v1075
        %1134 = vst [vmem:[%s328 + $0x98] sm:$0xff] %v1077
        %1135 = vst [vmem:[%s328 + $0xa0] sm:$0xff] %v1081
        %1136 = vst [vmem:[%s328 + $0xa8] sm:$0xff] %v1083
        %1137 = vst [vmem:[%s328 + $0xb0] sm:$0xff] %v1087
        %1138 = vst [vmem:[%s328 + $0xb8] sm:$0xff] %v1089
        %1139 = vst [vmem:[%s328 + $0xc0] sm:$0xff] %v1093
        %1140 = vst [vmem:[%s328 + $0xc8] sm:$0xff] %v1095
        %1141 = vst [vmem:[%s328 + $0xd0] sm:$0xff] %v1099
        %1142 = vst [vmem:[%s328 + $0xd8] sm:$0xff] %v1101
        %1143 = vst [vmem:[%s328 + $0xe0] sm:$0xff] %v1105
        %1144 = vst [vmem:[%s328 + $0xe8] sm:$0xff] %v1107
        %1145 = vst [vmem:[%s328 + $0xf0] sm:$0xff] %v1111
        %1146 = vst [vmem:[%s328 + $0xf8] sm:$0xff] %v1113
        %s1147 = sand.u32 %s164, 1
        %s1148 = scalar_lea.sflag [#allocation4], %s1147
        %s1149 = sand.u32 %s164, 1
        %s1150 = smul.addr %s1149, 256
        %s1151 = scalar_lea.vmem [#allocation11], %s1150
        // Predicated region
        $region65: #{tpu_custom_call.1} parent=43 // pred_check
          %p1152 = pneg %p174
        $region66: #{tpu_custom_call.1} parent=43 // pred_check_branch
          %1154 = sbr.rel (%p1152) target = $region68
        $region67: #{tpu_custom_call.1} parent=43 // pred_region
          %s1155 = smul.u32 16, %s25
          %s1157 = ssub.s32 4096, 4096
          %1158 = vsyncadd %s1148, %s1157
          %s1159 = smul.addr %s1155, 2
          %s1160 = smul.addr %s1159, 128
          %s1161 = scalar_lea.hbm %s6, %s1160
          %s1162 = sshll.u32 %s1151, 4
          %s1163 = int_to_ptr.vmem [resolvable:$true] %s1162
          %1168 = dma.vmem_to_hbm [thread:$0]  %s1163, 4096, %s1161, %s1148, 256, 256, 16
        $region68: #{tpu_custom_call.1} parent=43 // pred_fallthru
          _
      $region44: #{tpu_custom_call.1} parent=5 // pred_fallthru
        _
      %p1169 = scmp.le.s32.totalorder 2, %s20
      // Predicated region
      $region69: #{tpu_custom_call.1} parent=5 // pred_check
        %p1170 = pneg %p1169
      $region70: #{tpu_custom_call.1} parent=5 // pred_check_branch
        %1172 = sbr.rel (%p1170) target = $region72
      $region71: #{tpu_custom_call.1} parent=5 // pred_region
        %s1173 = ssub.s32 %s20, 2
        // Predicated region
        $region73: #{tpu_custom_call.1} parent=71 // pred_check
          %p1174 = pneg %p180
        $region74: #{tpu_custom_call.1} parent=71 // pred_check_branch
          %1176 = sbr.rel (%p1174) target = $region76
        $region75: #{tpu_custom_call.1} parent=71 // pred_region
          %s1177 = sand.u32 %s165, 1
          %s1178 = scalar_lea.sflag [#allocation4], %s1177
          %s1179 = sand.u32 %s165, 1
          %s1180 = smul.addr %s1179, 256
          %s1181 = scalar_lea.vmem [#allocation11], %s1180
          %1182 = dma.done %s1178, 4096
        $region76: #{tpu_custom_call.1} parent=71 // pred_fallthru
          _
      $region72: #{tpu_custom_call.1} parent=5 // pred_fallthru
        _
    $region6: #{tpu_custom_call.1} parent=1 // loop_footer
      %s24 = sadd.s32 1, %s20
    $region7: #{tpu_custom_call.1} parent=1 // loop_footer_branch
      %19 = sbr.rel target = $region3
    $region8: #{tpu_custom_call.1} parent=1 // loop_exit
      _
    %1183 = vsyncpa [#allocation3], 1
    %s1184 = scalar_lea.sflag [#allocation3], 1
    %1185 = vsyncpa %s1184, 1
    %1186 = vsyncpa [#allocation6], 1
    %1187 = vsyncpa [#allocation9], 1
    %1188 = vsyncpa [#allocation4], 1
    %s1189 = scalar_lea.sflag [#allocation4], 1
    %1190 = vsyncpa %s1189, 1

</llo_original>
